<compile_context>
chip_gen: v7x
topology: tpu7x:2x2x1
jax: 0.10.0
libtpu: 0.0.40
codegen_flags: <defaults>
</compile_context>

<pallas_src>
import jax
import jax.numpy as jnp
from jax import lax
from jax.experimental import pallas as pl
from jax.experimental.pallas import tpu as pltpu


def _landmark1x1_kernel(x_ref, w_ref, b_ref, o_ref):
    # x_ref: (C, t)   channel-major spatial tile (fused NCHW->NHWC)
    # w_ref: (C, O)   full 1x1-conv weight, resident across the grid
    # b_ref: (1, O)   bias row
    # o_ref: (t, O)   NHWC-ordered output rows for this tile
    acc = lax.dot_general(
        x_ref[...],
        w_ref[...],
        dimension_numbers=(((0,), (0,)), ((), ())),  # contract C on both sides
        preferred_element_type=jnp.float32,
    )
    o_ref[...] = (acc + b_ref[...].astype(jnp.float32)).astype(o_ref.dtype)


def _pick_spatial_tile(HW, C, N, itemsize, t_hw=None):
    """Choose the spatial tile width t (multiple of 128, or full HW)."""
    if t_hw is not None:
        t = min(int(t_hw), HW)
    else:
        target_bytes = 3 << 20                      # ~3 MiB (C, t) activation tile
        t = max(128, target_bytes // max(C * itemsize, 1))
        t = min(t, 8192, HW)
        # v7x has 2 TensorCores: with a single-image batch, make sure the
        # spatial axis contributes >=2 parallel grid steps.
        if N == 1 and t >= HW and HW >= 256:
            t = HW // 2
    if t < HW:
        t = max(128, (t // 128) * 128)
    else:
        t = HW
    return t


def landmark_head(x_nchw, weight, bias, *, num_anchors=3, t_hw=None,
                  out_dtype=None):
    """Pallas implementation of LandmarkHead.forward.

    x_nchw : (N, C_in, H, W)                       (f32 or bf16 — used as-is)
    weight : (A*10, C_in) or (A*10, C_in, 1, 1)    (PyTorch conv1x1 weight)
    bias   : (A*10,)
    t_hw   : optional explicit spatial tile override (rounded to 128).
    out_dtype: optional output dtype (e.g. bf16 for small-C configs if the
               downstream decode tolerates it); defaults to x's dtype.
    returns: (N, H*W*A, 10)
    """
    N, C, H, W = x_nchw.shape
    O = num_anchors * 10
    HW = H * W

    # Free reshapes / tiny weight prep (no activation transpose, no dtype cast).
    x = x_nchw.reshape(N, C, HW)
    w_mat = weight.reshape(O, C).T.astype(x.dtype)  # (C, O)
    b_row = bias.reshape(1, O).astype(jnp.float32)
    if out_dtype is None:
        out_dtype = x_nchw.dtype

    itemsize = jnp.dtype(x.dtype).itemsize
    out_itemsize = jnp.dtype(out_dtype).itemsize

    t = _pick_spatial_tile(HW, C, N, itemsize, t_hw=t_hw)
    grid = (N, pl.cdiv(HW, t))                      # ragged tail handled by masking

    # Advisory cost estimate with the real element sizes.
    cost = pl.CostEstimate(
        flops=2 * N * HW * C * O,
        transcendentals=0,
        bytes_accessed=(itemsize * (N * HW * C + C * O)
                        + out_itemsize * N * HW * O),
    )

    # Only raise the scoped-VMEM limit when an (explicit) large tile needs it;
    # keep the request modest so v7x's 64 MiB physical VMEM stays comfortable.
    est_vmem = (2 * C * t * itemsize            # x double buffer
                + 2 * t * O * out_itemsize      # out double buffer
                + 2 * C * O * itemsize          # weight
                + (1 << 20))                    # bias / headroom
    cp_kwargs = dict(dimension_semantics=("parallel", "parallel"))
    if est_vmem > (14 << 20):
        cp_kwargs["vmem_limit_bytes"] = int(min(est_vmem + (4 << 20), 48 << 20))

    out = pl.pallas_call(
        _landmark1x1_kernel,
        out_shape=jax.ShapeDtypeStruct((N, HW, O), out_dtype),
        grid_spec=pltpu.PrefetchScalarGridSpec(
            num_scalar_prefetch=0,
            grid=grid,
            in_specs=[
                # (C, t) channel-major activation tile of image n
                pl.BlockSpec((None, C, t), lambda n, i: (n, 0, i)),
                # full weight, resident across the grid
                pl.BlockSpec((C, O), lambda n, i: (0, 0)),
                # bias row, resident
                pl.BlockSpec((1, O), lambda n, i: (0, 0)),
            ],
            out_specs=pl.BlockSpec((None, t, O), lambda n, i: (n, i, 0)),
        ),
        compiler_params=pltpu.CompilerParams(**cp_kwargs),
        cost_estimate=cost,
    )(x, w_mat, b_row)

    # (N, H*W, A*10) -> (N, H*W*A, 10): matches permute(0,2,3,1).view(N,-1,10)
    return out.reshape(N, HW * num_anchors, 10)


if __name__ == "__main__":
    # Small, deterministic example consistent with the module's forward.
    N, C_in, H, W = 2, 32, 32, 32
    num_anchors = 3
    O = num_anchors * 10

    key = jax.random.PRNGKey(0)
    kx, kw, kb = jax.random.split(key, 3)

    x = jax.random.normal(kx, (N, C_in, H, W), dtype=jnp.float32)
    # Conv2d(C_in, A*10, kernel_size=1) weight has shape (A*10, C_in, 1, 1);
    # we keep the squeezed (A*10, C_in) form. Deterministic synthetic init.
    weight = jax.random.normal(kw, (O, C_in), dtype=jnp.float32) * 0.05
    bias = jax.random.normal(kb, (O,), dtype=jnp.float32) * 0.01

    # Plain-JAX reference of the same forward.
    ref = jnp.einsum("nchw,oc->nhwo", x, weight) + bias
    ref = ref.reshape(N, H * W * num_anchors, 10)

    # 1) Auto-derived (large) tile: HW <= t path, grid (N, 1).
    out = landmark_head(x, weight, bias, num_anchors=num_anchors)
    out = jax.block_until_ready(out)
    assert out.shape == (N, H * W * num_anchors, 10)
    assert jnp.allclose(out, ref, atol=1e-4, rtol=1e-4)

    # 2) Explicit small tile with a ragged tail: HW=1024, t=384 -> 3 blocks,
    #    last block only 256 valid rows (exercises partial-block masking).
    out_ragged = landmark_head(x, weight, bias, num_anchors=num_anchors,
                               t_hw=384)
    out_ragged = jax.block_until_ready(out_ragged)
    assert jnp.allclose(out_ragged, ref, atol=1e-4, rtol=1e-4)

    print("KERNEL_OK")
</pallas_src>

<mosaic_0001>
module attributes {stable_mosaic.version = 11 : i64} {
  func.func @_landmark1x1_kernel(%arg0: i32, %arg1: i32, %arg2: memref<1x32x1024xf32, #tpu.memory_space<vmem>>, %arg3: memref<32x30xf32, #tpu.memory_space<vmem>>, %arg4: memref<1x30xf32, #tpu.memory_space<vmem>>, %arg5: memref<1x1024x30xf32, #tpu.memory_space<vmem>>) attributes {dimension_semantics = [#tpu.dimension_semantics<parallel>, #tpu.dimension_semantics<parallel>], iteration_bounds = array<i64: 2, 1>, scalar_prefetch = 0 : i64, scratch_operands = 0 : i64, tpu.core_type = #tpu.core_type<tc>, window_params = [{transform_indices = @transform_0, window_bounds = array<i64: 1, 32, 1024>}, {pipeline_mode = #tpu.pipeline_mode<synchronous>, transform_indices = @transform_1, window_bounds = array<i64: 32, 30>}, {pipeline_mode = #tpu.pipeline_mode<synchronous>, transform_indices = @transform_2, window_bounds = array<i64: 1, 30>}, {transform_indices = @transform_3, window_bounds = array<i64: 1, 1024, 30>}]} {
    %c0 = arith.constant 0 : index
    %c0_0 = arith.constant 0 : index
    %c0_1 = arith.constant 0 : index
    %0 = vector.load %arg2[%c0, %c0_0, %c0_1] : memref<1x32x1024xf32, #tpu.memory_space<vmem>>, vector<1x32x1024xf32>
    %1 = vector.shape_cast %0 : vector<1x32x1024xf32> to vector<32x1024xf32>
    %c0_2 = arith.constant 0 : index
    %c0_3 = arith.constant 0 : index
    %2 = vector.load %arg3[%c0_2, %c0_3] : memref<32x30xf32, #tpu.memory_space<vmem>>, vector<32x30xf32>
    %cst = arith.constant dense<0.000000e+00> : vector<1024x30xf32>
    %3 = tpu.matmul %1, %2, %cst {dimension_numbers = #tpu.dot_dimension_numbers<[0], [0], [1], [1], [0, 1, 1, 1], [], []>} : vector<32x1024xf32>, vector<32x30xf32>, vector<1024x30xf32> -> vector<1024x30xf32>
    %c0_4 = arith.constant 0 : index
    %c0_5 = arith.constant 0 : index
    %4 = vector.load %arg4[%c0_4, %c0_5] : memref<1x30xf32, #tpu.memory_space<vmem>>, vector<1x30xf32>
    %5 = vector.broadcast %4 : vector<1x30xf32> to vector<1024x30xf32>
    %6 = arith.addf %3, %5 : vector<1024x30xf32>
    %c0_6 = arith.constant 0 : index
    %c0_7 = arith.constant 0 : index
    %c0_8 = arith.constant 0 : index
    %7 = vector.load %arg5[%c0_6, %c0_7, %c0_8] : memref<1x1024x30xf32, #tpu.memory_space<vmem>>, vector<1x1024x30xf32>
    %8 = vector.shape_cast %7 : vector<1x1024x30xf32> to vector<1024x30xf32>
    %9 = vector.shape_cast %6 : vector<1024x30xf32> to vector<1x1024x30xf32>
    tpu.vector_store %arg5[%c0_6, %c0_7, %c0_8], %9 {strides = array<i32>} : memref<1x1024x30xf32, #tpu.memory_space<vmem>>, vector<1x1024x30xf32>,
    return
  }
  func.func @transform_0(%arg0: i32, %arg1: i32) -> (i32, i32, i32) {
    %c0_i32 = arith.constant 0 : i32
    %c0_i32_0 = arith.constant 0 : i32
    return %arg0, %c0_i32, %arg1 : i32, i32, i32
  }
  func.func @transform_1(%arg0: i32, %arg1: i32) -> (i32, i32) {
    %c0_i32 = arith.constant 0 : i32
    %c0_i32_0 = arith.constant 0 : i32
    %c0_i32_1 = arith.constant 0 : i32
    return %c0_i32, %c0_i32_0 : i32, i32
  }
  func.func @transform_2(%arg0: i32, %arg1: i32) -> (i32, i32) {
    %c0_i32 = arith.constant 0 : i32
    %c0_i32_0 = arith.constant 0 : i32
    %c0_i32_1 = arith.constant 0 : i32
    return %c0_i32, %c0_i32_0 : i32, i32
  }
  func.func @transform_3(%arg0: i32, %arg1: i32) -> (i32, i32, i32) {
    %c0_i32 = arith.constant 0 : i32
    %c0_i32_0 = arith.constant 0 : i32
    return %arg0, %arg1, %c0_i32 : i32, i32, i32
  }
}

</mosaic_0001>

<llo_original>
// kernel: tpu_custom_call.1
$region0: #{tpu_custom_call.1}
  #allocation0 [shape = 'u32[]', space=smem, size = 0x4, offset = 0x4, fixed_abs, tag = 'smem constant byte address 0x4 - core index']
  #allocation1 [shape = 'u32[144,128]{1,0:T(1,128)}', space=vmem, size = 0x12000, scoped, tag = 'internal scratch']
  %s0 = inlined_call_operand.hbm [shape: f32[2,32,1024], index: 0, kind: input, shape index: {}]
  %s1 = inlined_call_operand.hbm [shape: f32[32,30], index: 1, kind: input, shape index: {}]
  %s2 = inlined_call_operand.vmem [shape: f32[1,30], index: 2, kind: input, shape index: {}]
  %s3 = inlined_call_operand.vmem [shape: f32[2,1024,30], index: 3, kind: output, shape index: {}]
  %s4 = sld [smem:[#allocation0]]
  $region53: #{tpu_custom_call.1} parent=0
    _
  %s6 = ssub.s32 1, %s4
  %s7 = scalar_select 0, %s6, %s4
  $region1: #{tpu_custom_call.1} parent=0
    #allocation2 [shape = 'u8[262144]{0}', space=vmem, size = 0x40000, scoped, tag = 'input window, operand 0']
    #allocation3 [shape = 's32[2]{0}', space=sflag, size = 0x8, scoped, tag = 'scoped memory for tpu_custom_call.1']
    #allocation4 [shape = 'u8[16384]{0}', space=vmem, size = 0x4000, scoped, tag = 'input window, operand 1, single buffered']
    #allocation5 [shape = 's32[1]{0}', space=sflag, size = 0x4, scoped, tag = 'scoped memory for tpu_custom_call.1']
    %8 = vsyncpa [#allocation3], 0
    %s9 = scalar_lea.sflag [#allocation3], 1
    %10 = vsyncpa %s9, 0
    %11 = vsyncpa [#allocation5], 0
    loop: start=0, step=1, limit=4
    $region2: #{tpu_custom_call.1} parent=1 // loop_pre_header
      _
    $region3: #{tpu_custom_call.1} parent=1 // loop_header
      %s13 = sphi 0, %s17
      %p14 = scmp.ge.s32.totalorder %s13, 4
      %s20 = sphi 0, %s32
      %s21 = sphi 0, %s28
      %s22 = sphi 0, %s20
      %s23 = sphi 0, %s21
      %s24 = sphi 0, %s22
      %s25 = sphi 0, %s23
      %s37 = sphi 0, %s39
      %s40 = sphi 0, %s37
      %s41 = sphi 0, %s40
      %s57 = sphi 0, %s41
      %s61 = sphi 0, %s61
      %s63 = sphi 0, %s61
      %s64 = sphi 0, %s63
      %s78 = sphi 0, %s64
      %s82 = sphi 0, %s82
      %s84 = sphi 0, %s82
      %s85 = sphi 0, %s84
      %s99 = sphi 0, %s85
      %s107 = sphi 0, %s109
      %s110 = sphi 0, %s107
      %s111 = sphi 0, %s110
      %s127 = sphi 0, %s111
    $region4: #{tpu_custom_call.1} parent=1 // loop_header_branch
      %16 = sbr.rel (%p14) target = $region8
    $region5: #{tpu_custom_call.1} parent=1 // loop_body
      %s18 = ssub.s32 %s13, 1
      %s19 = ssub.s32 %s13, 2
      %s26 = sadd.s32 1, %s21
      %p27 = scmp.ge.s32.totalorder %s26, 1
      %s28 = scalar_select %p27, 0, %s26
      %s29 = sadd.s32 1, %s20
      %s30 = scalar_select %p27, %s29, %s20
      %p31 = scmp.ge.s32.totalorder %s30, 2
      %s32 = scalar_select %p31, 0, %s30
      %s33 = ssub.s32 %s20, %s32
      %s34 = ssub.s32 %s21, %s28
      %s35 = sor.u32 %s33, %s34
      %p36 = scmp.eq.s32.totalorder %s35, 0
      %s38 = sadd.s32 %s37, 1
      %s39 = scalar_select %p36, %s37, %s38
      %p42 = pneg %p36
      %p43 = scmp.eq.s32.totalorder %s13, 1
      %p44 = por %p42, %p43
      %p45 = scmp.ne.s32.totalorder %s37, %s40
      %p46 = scmp.eq.s32.totalorder %s13, 0
      %p47 = por %p45, %p46
      %p48 = scmp.ne.s32.totalorder %s37, %s40
      %p49 = scmp.eq.s32.totalorder %s18, 1
      %p50 = por %p48, %p49
      %p51 = scmp.ne.s32.totalorder %s40, %s41
      %p52 = scmp.eq.s32.totalorder %s18, 0
      %p53 = por %p51, %p52
      %p54 = scmp.ne.s32.totalorder %s40, %s41
      %p55 = scmp.eq.s32.totalorder %s19, 1
      %p56 = por %p54, %p55
      %p58 = scmp.ne.s32.totalorder %s41, %s57
      %p59 = scmp.eq.s32.totalorder %s19, 0
      %p60 = por %p58, %p59
      %s62 = sadd.s32 %s61, 1
      %p65 = scmp.eq.s32.totalorder %s13, 1
      %p66 = scmp.ne.s32.totalorder %s61, %s63
      %p67 = scmp.eq.s32.totalorder %s13, 0
      %p68 = por %p66, %p67
      %p69 = scmp.ne.s32.totalorder %s61, %s63
      %p70 = scmp.eq.s32.totalorder %s18, 1
      %p71 = por %p69, %p70
      %p72 = scmp.ne.s32.totalorder %s63, %s64
      %p73 = scmp.eq.s32.totalorder %s18, 0
      %p74 = por %p72, %p73
      %p75 = scmp.ne.s32.totalorder %s63, %s64
      %p76 = scmp.eq.s32.totalorder %s19, 1
      %p77 = por %p75, %p76
      %p79 = scmp.ne.s32.totalorder %s64, %s78
      %p80 = scmp.eq.s32.totalorder %s19, 0
      %p81 = por %p79, %p80
      %s83 = sadd.s32 %s82, 1
      %p86 = scmp.eq.s32.totalorder %s13, 1
      %p87 = scmp.ne.s32.totalorder %s82, %s84
      %p88 = scmp.eq.s32.totalorder %s13, 0
      %p89 = por %p87, %p88
      %p90 = scmp.ne.s32.totalorder %s82, %s84
      %p91 = scmp.eq.s32.totalorder %s18, 1
      %p92 = por %p90, %p91
      %p93 = scmp.ne.s32.totalorder %s84, %s85
      %p94 = scmp.eq.s32.totalorder %s18, 0
      %p95 = por %p93, %p94
      %p96 = scmp.ne.s32.totalorder %s84, %s85
      %p97 = scmp.eq.s32.totalorder %s19, 1
      %p98 = por %p96, %p97
      %p100 = scmp.ne.s32.totalorder %s85, %s99
      %p101 = scmp.eq.s32.totalorder %s19, 0
      %p102 = por %p100, %p101
      %s103 = ssub.s32 %s20, %s32
      %s104 = ssub.s32 %s21, %s28
      %s105 = sor.u32 %s103, %s104
      %p106 = scmp.eq.s32.totalorder %s105, 0
      %s108 = sadd.s32 %s107, 1
      %s109 = scalar_select %p106, %s107, %s108
      %p112 = pneg %p106
      %p113 = scmp.eq.s32.totalorder %s13, 1
      %p114 = por %p112, %p113
      %p115 = scmp.ne.s32.totalorder %s107, %s110
      %p116 = scmp.eq.s32.totalorder %s13, 0
      %p117 = por %p115, %p116
      %p118 = scmp.ne.s32.totalorder %s107, %s110
      %p119 = scmp.eq.s32.totalorder %s18, 1
      %p120 = por %p118, %p119
      %p121 = scmp.ne.s32.totalorder %s110, %s111
      %p122 = scmp.eq.s32.totalorder %s18, 0
      %p123 = por %p121, %p122
      %p124 = scmp.ne.s32.totalorder %s110, %s111
      %p125 = scmp.eq.s32.totalorder %s19, 1
      %p126 = por %p124, %p125
      %p128 = scmp.ne.s32.totalorder %s111, %s127
      %p129 = scmp.eq.s32.totalorder %s19, 0
      %p130 = por %p128, %p129
      %p131 = scmp.le.s32.totalorder 1, %s13
      %p132 = scmp.lt.s32.totalorder %s13, 3
      %p133 = pnand %p131, %p132
      %p134 = pneg %p133
      // Predicated region
      $region9: #{tpu_custom_call.1} parent=5 // pred_check
        _
      $region10: #{tpu_custom_call.1} parent=5 // pred_check_branch
        %136 = sbr.rel (%p133) target = $region12
      $region11: #{tpu_custom_call.1} parent=5 // pred_region
        %s137 = ssub.s32 %s13, 1
        // Predicated region
        $region13: #{tpu_custom_call.1} parent=11 // pred_check
          %p138 = pneg %p74
        $region14: #{tpu_custom_call.1} parent=11 // pred_check_branch
          %140 = sbr.rel (%p138) target = $region16
        $region15: #{tpu_custom_call.1} parent=11 // pred_region
          %s142 = ssub.s32 512, 512
          %143 = vsyncadd [#allocation5], %s142
          %s144 = sshll.u32 [#allocation4], 4
          %s145 = int_to_ptr.vmem [resolvable:$true] %s144
          %150 = dma.hbm_to_vmem [thread:$0]  %s1, 512, %s145, [#allocation5], 128, 128, 8
        $region16: #{tpu_custom_call.1} parent=11 // pred_fallthru
          _
        // Predicated region
        $region17: #{tpu_custom_call.1} parent=11 // pred_check
          %p151 = pneg %p95
        $region18: #{tpu_custom_call.1} parent=11 // pred_check_branch
          %153 = sbr.rel (%p151) target = $region20
        $region19: #{tpu_custom_call.1} parent=11 // pred_region
          _
        $region20: #{tpu_custom_call.1} parent=11 // pred_fallthru
          _
      $region12: #{tpu_custom_call.1} parent=5 // pred_fallthru
        _
      %p154 = scmp.lt.s32.totalorder %s13, 2
      // Predicated region
      $region21: #{tpu_custom_call.1} parent=5 // pred_check
        %p155 = pneg %p154
      $region22: #{tpu_custom_call.1} parent=5 // pred_check_branch
        %157 = sbr.rel (%p155) target = $region24
      $region23: #{tpu_custom_call.1} parent=5 // pred_region
        // Predicated region
        $region25: #{tpu_custom_call.1} parent=23 // pred_check
          %p158 = pneg %p47
        $region26: #{tpu_custom_call.1} parent=23 // pred_check_branch
          %160 = sbr.rel (%p158) target = $region28
        $region27: #{tpu_custom_call.1} parent=23 // pred_region
          %s161 = sand.u32 %s37, 1
          %s162 = scalar_lea.sflag [#allocation3], %s161
          %s163 = sand.u32 %s37, 1
          %s164 = smul.addr %s163, 256
          %s165 = scalar_lea.vmem [#allocation2], %s164
          %s166 = smul.u32 8, %s21
          %s168 = ssub.s32 4096, 4096
          %169 = vsyncadd %s162, %s168
          %s170 = smul.addr %s20, 32
          %s171 = sadd.s32 %s166, %s170
          %s172 = smul.addr %s171, 128
          %s173 = scalar_lea.hbm %s0, %s172
          %s174 = sshll.u32 %s165, 4
          %s175 = int_to_ptr.vmem [resolvable:$true] %s174
          %180 = dma.hbm_to_vmem [thread:$0]  %s173, 4096, %s175, %s162, 1024, 1024, 64
        $region28: #{tpu_custom_call.1} parent=23 // pred_fallthru
          _
      $region24: #{tpu_custom_call.1} parent=5 // pred_fallthru
        _
      %p181 = scmp.le.s32.totalorder 1, %s13
      %p182 = scmp.lt.s32.totalorder %s13, 3
      %p183 = pnand %p181, %p182
      %p184 = pneg %p183
      // Predicated region
      $region29: #{tpu_custom_call.1} parent=5 // pred_check
        _
      $region30: #{tpu_custom_call.1} parent=5 // pred_check_branch
        %186 = sbr.rel (%p183) target = $region32
      $region31: #{tpu_custom_call.1} parent=5 // pred_region
        %s187 = ssub.s32 %s13, 1
        %s188 = sand.u32 %s40, 1
        %s189 = scalar_lea.sflag [#allocation3], %s188
        %s190 = sand.u32 %s40, 1
        %s191 = smul.addr %s190, 256
        %s192 = scalar_lea.vmem [#allocation2], %s191
        // Predicated region
        $region33: #{tpu_custom_call.1} parent=31 // pred_check
          %p193 = pneg %p53
        $region34: #{tpu_custom_call.1} parent=31 // pred_check_branch
          %195 = sbr.rel (%p193) target = $region36
        $region35: #{tpu_custom_call.1} parent=31 // pred_region
          %196 = dma.done %s189, 4096
        $region36: #{tpu_custom_call.1} parent=31 // pred_fallthru
          _
        // Predicated region
        $region37: #{tpu_custom_call.1} parent=31 // pred_check
          %p197 = pneg %p74
        $region38: #{tpu_custom_call.1} parent=31 // pred_check_branch
          %199 = sbr.rel (%p197) target = $region40
        $region39: #{tpu_custom_call.1} parent=31 // pred_region
          %200 = dma.done [#allocation5], 512
        $region40: #{tpu_custom_call.1} parent=31 // pred_fallthru
          _
        %s201 = sand.u32 %s40, 1
        %s202 = scalar_lea.sflag [#allocation3], %s201
        %s203 = sand.u32 %s40, 1
        %s204 = smul.addr %s203, 256
        %s205 = scalar_lea.vmem [#allocation2], %s204
        %p206 = pneg %p53
        %p207 = pneg %p50
        %p208 = pneg %p74
        %p209 = pneg %p71
        %p210 = pneg %p95
        %p211 = pneg %p92
        %p212 = pneg %p123
        %p213 = pneg %p120
        %s214 = smul.u32 128, %s23
        %p215 = scmp.lt.s32.totalorder %s22, 1
        %s216 = scalar_select %p215, %s22, 1
        %p217 = scmp.lt.s32.totalorder %s214, 127
        %s218 = scalar_select %p217, %s214, 127
        %s219 = smul.addr %s216, 128
        %s220 = sadd.s32 %s218, %s219
        %s221 = smul.addr %s220, 8
        %s222 = scalar_lea.vmem %s3, %s221
        %s223 = smul.u32 8, %s23
        %s224 = smul.u32 128, %s23
        %p225 = scmp.lt.s32.totalorder %s22, 1
        %s226 = scalar_select %p225, %s22, 1
        %p227 = scmp.lt.s32.totalorder %s224, 127
        %s228 = scalar_select %p227, %s224, 127
        %s229 = smul.addr %s226, 128
        %s230 = sadd.s32 %s228, %s229
        %s231 = smul.addr %s230, 8
        %s232 = scalar_lea.vmem %s3, %s231
        %s233 = smul.u32 128, %s23
        %v234 = vld [vmem:[%s192] sm:$0xff]
        %v235 = vld [vmem:[%s192 + $0x8] sm:$0xff]
        %v236 = vld [vmem:[%s192 + $0x10] sm:$0xff]
        %v237 = vld [vmem:[%s192 + $0x18] sm:$0xff]
        %v238 = vld [vmem:[%s192 + $0x20] sm:$0xff]
        %v239 = vld [vmem:[%s192 + $0x28] sm:$0xff]
        %v240 = vld [vmem:[%s192 + $0x30] sm:$0xff]
        %v241 = vld [vmem:[%s192 + $0x38] sm:$0xff]
        %v242 = vld [vmem:[%s192 + $0x40] sm:$0xff]
        %v243 = vld [vmem:[%s192 + $0x48] sm:$0xff]
        %v244 = vld [vmem:[%s192 + $0x50] sm:$0xff]
        %v245 = vld [vmem:[%s192 + $0x58] sm:$0xff]
        %v246 = vld [vmem:[%s192 + $0x60] sm:$0xff]
        %v247 = vld [vmem:[%s192 + $0x68] sm:$0xff]
        %v248 = vld [vmem:[%s192 + $0x70] sm:$0xff]
        %v249 = vld [vmem:[%s192 + $0x78] sm:$0xff]
        %v250 = vld [vmem:[%s192 + $0x80] sm:$0xff]
        %v251 = vld [vmem:[%s192 + $0x88] sm:$0xff]
        %v252 = vld [vmem:[%s192 + $0x90] sm:$0xff]
        %v253 = vld [vmem:[%s192 + $0x98] sm:$0xff]
        %v254 = vld [vmem:[%s192 + $0xa0] sm:$0xff]
        %v255 = vld [vmem:[%s192 + $0xa8] sm:$0xff]
        %v256 = vld [vmem:[%s192 + $0xb0] sm:$0xff]
        %v257 = vld [vmem:[%s192 + $0xb8] sm:$0xff]
        %v258 = vld [vmem:[%s192 + $0xc0] sm:$0xff]
        %v259 = vld [vmem:[%s192 + $0xc8] sm:$0xff]
        %v260 = vld [vmem:[%s192 + $0xd0] sm:$0xff]
        %v261 = vld [vmem:[%s192 + $0xd8] sm:$0xff]
        %v262 = vld [vmem:[%s192 + $0xe0] sm:$0xff]
        %v263 = vld [vmem:[%s192 + $0xe8] sm:$0xff]
        %v264 = vld [vmem:[%s192 + $0xf0] sm:$0xff]
        %v265 = vld [vmem:[%s192 + $0xf8] sm:$0xff]
        %v266 = vld [vmem:[#allocation4] sm:$0xff]
        %v267 = vld [vmem:[#allocation4 + $0x8] sm:$0xff]
        %v268 = vld [vmem:[#allocation4 + $0x10] sm:$0xff]
        %v269 = vld [vmem:[#allocation4 + $0x18] sm:$0xff]
        %v270 = vld [vmem:[%s2] sm:$0x1]
        %v272 = vlaneseq
        %v273 = vshrl.u32 %v272, 7
        %v274 = vsub.s32 0, %v273
        %v275 = vrot.slane %v270, %v274
        %277 = vxpose.xlu0.b32.start [1/16] %v234, 128
        %278 = vxpose.xlu0.b32.cont [2/16] %v242, 128
        %279 = vxpose.xlu0.b32.cont [3/16] %v250, 128
        %280 = vxpose.xlu0.b32.cont [4/16] %v258, 128
        %281 = vxpose.xlu0.b32.cont [5/16] 0.0, 128
        %282 = vxpose.xlu0.b32.cont [6/16] 0.0, 128
        %283 = vxpose.xlu0.b32.cont [7/16] 0.0, 128
        %284 = vxpose.xlu0.b32.cont [8/16] 0.0, 128
        %285 = vxpose.xlu0.b32.cont [9/16] 0.0, 128
        %286 = vxpose.xlu0.b32.cont [10/16] 0.0, 128
        %287 = vxpose.xlu0.b32.cont [11/16] 0.0, 128
        %288 = vxpose.xlu0.b32.cont [12/16] 0.0, 128
        %289 = vxpose.xlu0.b32.cont [13/16] 0.0, 128
        %290 = vxpose.xlu0.b32.cont [14/16] 0.0, 128
        %291 = vxpose.xlu0.b32.cont [15/16] 0.0, 128
        %292 = vxpose.xlu0.b32.end [16/16] 0.0, 128
        %v293 = vpop.trf.xlu0
        %v294 = vpop.trf.xlu0
        %v295 = vpop.trf.xlu0
        %v296 = vpop.trf.xlu0
        %v297 = vpop.trf.xlu0
        %v298 = vpop.trf.xlu0
        %v299 = vpop.trf.xlu0
        %v300 = vpop.trf.xlu0
        %v301 = vpop.trf.xlu0
        %v302 = vpop.trf.xlu0
        %v303 = vpop.trf.xlu0
        %v304 = vpop.trf.xlu0
        %v305 = vpop.trf.xlu0
        %v306 = vpop.trf.xlu0
        %v307 = vpop.trf.xlu0
        %v308 = vpop.trf.xlu0
        %309 = vxpose.xlu0.b32.start [1/16] %v235, 128
        %310 = vxpose.xlu0.b32.cont [2/16] %v243, 128
        %311 = vxpose.xlu0.b32.cont [3/16] %v251, 128
        %312 = vxpose.xlu0.b32.cont [4/16] %v259, 128
        %313 = vxpose.xlu0.b32.cont [5/16] 0.0, 128
        %314 = vxpose.xlu0.b32.cont [6/16] 0.0, 128
        %315 = vxpose.xlu0.b32.cont [7/16] 0.0, 128
        %316 = vxpose.xlu0.b32.cont [8/16] 0.0, 128
        %317 = vxpose.xlu0.b32.cont [9/16] 0.0, 128
        %318 = vxpose.xlu0.b32.cont [10/16] 0.0, 128
        %319 = vxpose.xlu0.b32.cont [11/16] 0.0, 128
        %320 = vxpose.xlu0.b32.cont [12/16] 0.0, 128
        %321 = vxpose.xlu0.b32.cont [13/16] 0.0, 128
        %322 = vxpose.xlu0.b32.cont [14/16] 0.0, 128
        %323 = vxpose.xlu0.b32.cont [15/16] 0.0, 128
        %324 = vxpose.xlu0.b32.end [16/16] 0.0, 128
        %v325 = vpop.trf.xlu0
        %v326 = vpop.trf.xlu0
        %v327 = vpop.trf.xlu0
        %v328 = vpop.trf.xlu0
        %v329 = vpop.trf.xlu0
        %v330 = vpop.trf.xlu0
        %v331 = vpop.trf.xlu0
        %v332 = vpop.trf.xlu0
        %v333 = vpop.trf.xlu0
        %v334 = vpop.trf.xlu0
        %v335 = vpop.trf.xlu0
        %v336 = vpop.trf.xlu0
        %v337 = vpop.trf.xlu0
        %v338 = vpop.trf.xlu0
        %v339 = vpop.trf.xlu0
        %v340 = vpop.trf.xlu0
        %341 = vxpose.xlu0.b32.start [1/16] %v236, 128
        %342 = vxpose.xlu0.b32.cont [2/16] %v244, 128
        %343 = vxpose.xlu0.b32.cont [3/16] %v252, 128
        %344 = vxpose.xlu0.b32.cont [4/16] %v260, 128
        %345 = vxpose.xlu0.b32.cont [5/16] 0.0, 128
        %346 = vxpose.xlu0.b32.cont [6/16] 0.0, 128
        %347 = vxpose.xlu0.b32.cont [7/16] 0.0, 128
        %348 = vxpose.xlu0.b32.cont [8/16] 0.0, 128
        %349 = vxpose.xlu0.b32.cont [9/16] 0.0, 128
        %350 = vxpose.xlu0.b32.cont [10/16] 0.0, 128
        %351 = vxpose.xlu0.b32.cont [11/16] 0.0, 128
        %352 = vxpose.xlu0.b32.cont [12/16] 0.0, 128
        %353 = vxpose.xlu0.b32.cont [13/16] 0.0, 128
        %354 = vxpose.xlu0.b32.cont [14/16] 0.0, 128
        %355 = vxpose.xlu0.b32.cont [15/16] 0.0, 128
        %356 = vxpose.xlu0.b32.end [16/16] 0.0, 128
        %v357 = vpop.trf.xlu0
        %v358 = vpop.trf.xlu0
        %v359 = vpop.trf.xlu0
        %v360 = vpop.trf.xlu0
        %v361 = vpop.trf.xlu0
        %v362 = vpop.trf.xlu0
        %v363 = vpop.trf.xlu0
        %v364 = vpop.trf.xlu0
        %v365 = vpop.trf.xlu0
        %v366 = vpop.trf.xlu0
        %v367 = vpop.trf.xlu0
        %v368 = vpop.trf.xlu0
        %v369 = vpop.trf.xlu0
        %v370 = vpop.trf.xlu0
        %v371 = vpop.trf.xlu0
        %v372 = vpop.trf.xlu0
        %373 = vxpose.xlu0.b32.start [1/16] %v237, 128
        %374 = vxpose.xlu0.b32.cont [2/16] %v245, 128
        %375 = vxpose.xlu0.b32.cont [3/16] %v253, 128
        %376 = vxpose.xlu0.b32.cont [4/16] %v261, 128
        %377 = vxpose.xlu0.b32.cont [5/16] 0.0, 128
        %378 = vxpose.xlu0.b32.cont [6/16] 0.0, 128
        %379 = vxpose.xlu0.b32.cont [7/16] 0.0, 128
        %380 = vxpose.xlu0.b32.cont [8/16] 0.0, 128
        %381 = vxpose.xlu0.b32.cont [9/16] 0.0, 128
        %382 = vxpose.xlu0.b32.cont [10/16] 0.0, 128
        %383 = vxpose.xlu0.b32.cont [11/16] 0.0, 128
        %384 = vxpose.xlu0.b32.cont [12/16] 0.0, 128
        %385 = vxpose.xlu0.b32.cont [13/16] 0.0, 128
        %386 = vxpose.xlu0.b32.cont [14/16] 0.0, 128
        %387 = vxpose.xlu0.b32.cont [15/16] 0.0, 128
        %388 = vxpose.xlu0.b32.end [16/16] 0.0, 128
        %v389 = vpop.trf.xlu0
        %v390 = vpop.trf.xlu0
        %v391 = vpop.trf.xlu0
        %v392 = vpop.trf.xlu0
        %v393 = vpop.trf.xlu0
        %v394 = vpop.trf.xlu0
        %v395 = vpop.trf.xlu0
        %v396 = vpop.trf.xlu0
        %v397 = vpop.trf.xlu0
        %v398 = vpop.trf.xlu0
        %v399 = vpop.trf.xlu0
        %v400 = vpop.trf.xlu0
        %v401 = vpop.trf.xlu0
        %v402 = vpop.trf.xlu0
        %v403 = vpop.trf.xlu0
        %v404 = vpop.trf.xlu0
        %405 = vxpose.xlu0.b32.start [1/16] %v238, 128
        %406 = vxpose.xlu0.b32.cont [2/16] %v246, 128
        %407 = vxpose.xlu0.b32.cont [3/16] %v254, 128
        %408 = vxpose.xlu0.b32.cont [4/16] %v262, 128
        %409 = vxpose.xlu0.b32.cont [5/16] 0.0, 128
        %410 = vxpose.xlu0.b32.cont [6/16] 0.0, 128
        %411 = vxpose.xlu0.b32.cont [7/16] 0.0, 128
        %412 = vxpose.xlu0.b32.cont [8/16] 0.0, 128
        %413 = vxpose.xlu0.b32.cont [9/16] 0.0, 128
        %414 = vxpose.xlu0.b32.cont [10/16] 0.0, 128
        %415 = vxpose.xlu0.b32.cont [11/16] 0.0, 128
        %416 = vxpose.xlu0.b32.cont [12/16] 0.0, 128
        %417 = vxpose.xlu0.b32.cont [13/16] 0.0, 128
        %418 = vxpose.xlu0.b32.cont [14/16] 0.0, 128
        %419 = vxpose.xlu0.b32.cont [15/16] 0.0, 128
        %420 = vxpose.xlu0.b32.end [16/16] 0.0, 128
        %v421 = vpop.trf.xlu0
        %v422 = vpop.trf.xlu0
        %v423 = vpop.trf.xlu0
        %v424 = vpop.trf.xlu0
        %v425 = vpop.trf.xlu0
        %v426 = vpop.trf.xlu0
        %v427 = vpop.trf.xlu0
        %v428 = vpop.trf.xlu0
        %v429 = vpop.trf.xlu0
        %v430 = vpop.trf.xlu0
        %v431 = vpop.trf.xlu0
        %v432 = vpop.trf.xlu0
        %v433 = vpop.trf.xlu0
        %v434 = vpop.trf.xlu0
        %v435 = vpop.trf.xlu0
        %v436 = vpop.trf.xlu0
        %437 = vxpose.xlu0.b32.start [1/16] %v239, 128
        %438 = vxpose.xlu0.b32.cont [2/16] %v247, 128
        %439 = vxpose.xlu0.b32.cont [3/16] %v255, 128
        %440 = vxpose.xlu0.b32.cont [4/16] %v263, 128
        %441 = vxpose.xlu0.b32.cont [5/16] 0.0, 128
        %442 = vxpose.xlu0.b32.cont [6/16] 0.0, 128
        %443 = vxpose.xlu0.b32.cont [7/16] 0.0, 128
        %444 = vxpose.xlu0.b32.cont [8/16] 0.0, 128
        %445 = vxpose.xlu0.b32.cont [9/16] 0.0, 128
        %446 = vxpose.xlu0.b32.cont [10/16] 0.0, 128
        %447 = vxpose.xlu0.b32.cont [11/16] 0.0, 128
        %448 = vxpose.xlu0.b32.cont [12/16] 0.0, 128
        %449 = vxpose.xlu0.b32.cont [13/16] 0.0, 128
        %450 = vxpose.xlu0.b32.cont [14/16] 0.0, 128
        %451 = vxpose.xlu0.b32.cont [15/16] 0.0, 128
        %452 = vxpose.xlu0.b32.end [16/16] 0.0, 128
        %v453 = vpop.trf.xlu0
        %v454 = vpop.trf.xlu0
        %v455 = vpop.trf.xlu0
        %v456 = vpop.trf.xlu0
        %v457 = vpop.trf.xlu0
        %v458 = vpop.trf.xlu0
        %v459 = vpop.trf.xlu0
        %v460 = vpop.trf.xlu0
        %v461 = vpop.trf.xlu0
        %v462 = vpop.trf.xlu0
        %v463 = vpop.trf.xlu0
        %v464 = vpop.trf.xlu0
        %v465 = vpop.trf.xlu0
        %v466 = vpop.trf.xlu0
        %v467 = vpop.trf.xlu0
        %v468 = vpop.trf.xlu0
        %469 = vxpose.xlu0.b32.start [1/16] %v240, 128
        %470 = vxpose.xlu0.b32.cont [2/16] %v248, 128
        %471 = vxpose.xlu0.b32.cont [3/16] %v256, 128
        %472 = vxpose.xlu0.b32.cont [4/16] %v264, 128
        %473 = vxpose.xlu0.b32.cont [5/16] 0.0, 128
        %474 = vxpose.xlu0.b32.cont [6/16] 0.0, 128
        %475 = vxpose.xlu0.b32.cont [7/16] 0.0, 128
        %476 = vxpose.xlu0.b32.cont [8/16] 0.0, 128
        %477 = vxpose.xlu0.b32.cont [9/16] 0.0, 128
        %478 = vxpose.xlu0.b32.cont [10/16] 0.0, 128
        %479 = vxpose.xlu0.b32.cont [11/16] 0.0, 128
        %480 = vxpose.xlu0.b32.cont [12/16] 0.0, 128
        %481 = vxpose.xlu0.b32.cont [13/16] 0.0, 128
        %482 = vxpose.xlu0.b32.cont [14/16] 0.0, 128
        %483 = vxpose.xlu0.b32.cont [15/16] 0.0, 128
        %484 = vxpose.xlu0.b32.end [16/16] 0.0, 128
        %v485 = vpop.trf.xlu0
        %v486 = vpop.trf.xlu0
        %v487 = vpop.trf.xlu0
        %v488 = vpop.trf.xlu0
        %v489 = vpop.trf.xlu0
        %v490 = vpop.trf.xlu0
        %v491 = vpop.trf.xlu0
        %v492 = vpop.trf.xlu0
        %v493 = vpop.trf.xlu0
        %v494 = vpop.trf.xlu0
        %v495 = vpop.trf.xlu0
        %v496 = vpop.trf.xlu0
        %v497 = vpop.trf.xlu0
        %v498 = vpop.trf.xlu0
        %v499 = vpop.trf.xlu0
        %v500 = vpop.trf.xlu0
        %501 = vxpose.xlu0.b32.start [1/16] %v241, 128
        %502 = vxpose.xlu0.b32.cont [2/16] %v249, 128
        %503 = vxpose.xlu0.b32.cont [3/16] %v257, 128
        %504 = vxpose.xlu0.b32.cont [4/16] %v265, 128
        %505 = vxpose.xlu0.b32.cont [5/16] 0.0, 128
        %506 = vxpose.xlu0.b32.cont [6/16] 0.0, 128
        %507 = vxpose.xlu0.b32.cont [7/16] 0.0, 128
        %508 = vxpose.xlu0.b32.cont [8/16] 0.0, 128
        %509 = vxpose.xlu0.b32.cont [9/16] 0.0, 128
        %510 = vxpose.xlu0.b32.cont [10/16] 0.0, 128
        %511 = vxpose.xlu0.b32.cont [11/16] 0.0, 128
        %512 = vxpose.xlu0.b32.cont [12/16] 0.0, 128
        %513 = vxpose.xlu0.b32.cont [13/16] 0.0, 128
        %514 = vxpose.xlu0.b32.cont [14/16] 0.0, 128
        %515 = vxpose.xlu0.b32.cont [15/16] 0.0, 128
        %516 = vxpose.xlu0.b32.end [16/16] 0.0, 128
        %v517 = vpop.trf.xlu0
        %v518 = vpop.trf.xlu0
        %v519 = vpop.trf.xlu0
        %v520 = vpop.trf.xlu0
        %v521 = vpop.trf.xlu0
        %v522 = vpop.trf.xlu0
        %v523 = vpop.trf.xlu0
        %v524 = vpop.trf.xlu0
        %v525 = vpop.trf.xlu0
        %v526 = vpop.trf.xlu0
        %v527 = vpop.trf.xlu0
        %v528 = vpop.trf.xlu0
        %v529 = vpop.trf.xlu0
        %v530 = vpop.trf.xlu0
        %v531 = vpop.trf.xlu0
        %v532 = vpop.trf.xlu0
        %vm533 = vcmask 261120
        %v535 = vsel %vm533, %v293, 0
        %v538 = vsel %vm533, %v294, 0
        %v541 = vsel %vm533, %v295, 0
        %v544 = vsel %vm533, %v296, 0
        %v547 = vsel %vm533, %v297, 0
        %v550 = vsel %vm533, %v298, 0
        %v553 = vsel %vm533, %v299, 0
        %v556 = vsel %vm533, %v300, 0
        %v559 = vsel %vm533, %v301, 0
        %v562 = vsel %vm533, %v302, 0
        %v565 = vsel %vm533, %v303, 0
        %v568 = vsel %vm533, %v304, 0
        %v571 = vsel %vm533, %v305, 0
        %v574 = vsel %vm533, %v306, 0
        %v577 = vsel %vm533, %v307, 0
        %v580 = vsel %vm533, %v308, 0
        %v583 = vsel %vm533, %v325, 0
        %v586 = vsel %vm533, %v326, 0
        %v589 = vsel %vm533, %v327, 0
        %v592 = vsel %vm533, %v328, 0
        %v595 = vsel %vm533, %v329, 0
        %v598 = vsel %vm533, %v330, 0
        %v601 = vsel %vm533, %v331, 0
        %v604 = vsel %vm533, %v332, 0
        %v607 = vsel %vm533, %v333, 0
        %v610 = vsel %vm533, %v334, 0
        %v613 = vsel %vm533, %v335, 0
        %v616 = vsel %vm533, %v336, 0
        %v619 = vsel %vm533, %v337, 0
        %v622 = vsel %vm533, %v338, 0
        %v625 = vsel %vm533, %v339, 0
        %v628 = vsel %vm533, %v340, 0
        %v631 = vsel %vm533, %v357, 0
        %v634 = vsel %vm533, %v358, 0
        %v637 = vsel %vm533, %v359, 0
        %v640 = vsel %vm533, %v360, 0
        %v643 = vsel %vm533, %v361, 0
        %v646 = vsel %vm533, %v362, 0
        %v649 = vsel %vm533, %v363, 0
        %v652 = vsel %vm533, %v364, 0
        %v655 = vsel %vm533, %v365, 0
        %v658 = vsel %vm533, %v366, 0
        %v661 = vsel %vm533, %v367, 0
        %v664 = vsel %vm533, %v368, 0
        %v667 = vsel %vm533, %v369, 0
        %v670 = vsel %vm533, %v370, 0
        %v673 = vsel %vm533, %v371, 0
        %v676 = vsel %vm533, %v372, 0
        %v679 = vsel %vm533, %v389, 0
        %v682 = vsel %vm533, %v390, 0
        %v685 = vsel %vm533, %v391, 0
        %v688 = vsel %vm533, %v392, 0
        %v691 = vsel %vm533, %v393, 0
        %v694 = vsel %vm533, %v394, 0
        %v697 = vsel %vm533, %v395, 0
        %v700 = vsel %vm533, %v396, 0
        %v703 = vsel %vm533, %v397, 0
        %v706 = vsel %vm533, %v398, 0
        %v709 = vsel %vm533, %v399, 0
        %v712 = vsel %vm533, %v400, 0
        %v715 = vsel %vm533, %v401, 0
        %v718 = vsel %vm533, %v402, 0
        %v721 = vsel %vm533, %v403, 0
        %v724 = vsel %vm533, %v404, 0
        %v727 = vsel %vm533, %v421, 0
        %v730 = vsel %vm533, %v422, 0
        %v733 = vsel %vm533, %v423, 0
        %v736 = vsel %vm533, %v424, 0
        %v739 = vsel %vm533, %v425, 0
        %v742 = vsel %vm533, %v426, 0
        %v745 = vsel %vm533, %v427, 0
        %v748 = vsel %vm533, %v428, 0
        %v751 = vsel %vm533, %v429, 0
        %v754 = vsel %vm533, %v430, 0
        %v757 = vsel %vm533, %v431, 0
        %v760 = vsel %vm533, %v432, 0
        %v763 = vsel %vm533, %v433, 0
        %v766 = vsel %vm533, %v434, 0
        %v769 = vsel %vm533, %v435, 0
        %v772 = vsel %vm533, %v436, 0
        %v775 = vsel %vm533, %v453, 0
        %v778 = vsel %vm533, %v454, 0
        %v781 = vsel %vm533, %v455, 0
        %v784 = vsel %vm533, %v456, 0
        %v787 = vsel %vm533, %v457, 0
        %v790 = vsel %vm533, %v458, 0
        %v793 = vsel %vm533, %v459, 0
        %v796 = vsel %vm533, %v460, 0
        %v799 = vsel %vm533, %v461, 0
        %v802 = vsel %vm533, %v462, 0
        %v805 = vsel %vm533, %v463, 0
        %v808 = vsel %vm533, %v464, 0
        %v811 = vsel %vm533, %v465, 0
        %v814 = vsel %vm533, %v466, 0
        %v817 = vsel %vm533, %v467, 0
        %v820 = vsel %vm533, %v468, 0
        %v823 = vsel %vm533, %v485, 0
        %v826 = vsel %vm533, %v486, 0
        %v829 = vsel %vm533, %v487, 0
        %v832 = vsel %vm533, %v488, 0
        %v835 = vsel %vm533, %v489, 0
        %v838 = vsel %vm533, %v490, 0
        %v841 = vsel %vm533, %v491, 0
        %v844 = vsel %vm533, %v492, 0
        %v847 = vsel %vm533, %v493, 0
        %v850 = vsel %vm533, %v494, 0
        %v853 = vsel %vm533, %v495, 0
        %v856 = vsel %vm533, %v496, 0
        %v859 = vsel %vm533, %v497, 0
        %v862 = vsel %vm533, %v498, 0
        %v865 = vsel %vm533, %v499, 0
        %v868 = vsel %vm533, %v500, 0
        %v871 = vsel %vm533, %v517, 0
        %v874 = vsel %vm533, %v518, 0
        %v877 = vsel %vm533, %v519, 0
        %v880 = vsel %vm533, %v520, 0
        %v883 = vsel %vm533, %v521, 0
        %v886 = vsel %vm533, %v522, 0
        %v889 = vsel %vm533, %v523, 0
        %v892 = vsel %vm533, %v524, 0
        %v895 = vsel %vm533, %v525, 0
        %v898 = vsel %vm533, %v526, 0
        %v901 = vsel %vm533, %v527, 0
        %v904 = vsel %vm533, %v528, 0
        %v907 = vsel %vm533, %v529, 0
        %v910 = vsel %vm533, %v530, 0
        %v913 = vsel %vm533, %v531, 0
        %v916 = vsel %vm533, %v532, 0
        %918 = vmatprep.subr.mxu0 0.0
        %919 = vmatpush1.msra.mxu0 %v266
        %920 = vmatprep.subr.mxu0 0.0
        %921 = vmatpush1.msra.mxu0 %v267
        %922 = vmatprep.subr.mxu0 0.0
        %923 = vmatpush1.msra.mxu0 %v268
        %924 = vmatprep.subr.mxu0 0.0
        %925 = vmatpush1.msra.mxu0 %v269
        %926 = vmatprep.subr.mxu0 0.0
        %927 = vmatpush1.msra.mxu0 0.0
        %928 = vmatprep.subr.mxu0 0.0
        %929 = vmatpush1.msra.mxu0 0.0
        %930 = vmatprep.subr.mxu0 0.0
        %931 = vmatpush1.msra.mxu0 0.0
        %932 = vmatprep.subr.mxu0 0.0
        %933 = vmatpush1.msra.mxu0 0.0
        %934 = vmatprep.subr.mxu0 0.0
        %935 = vmatpush1.msra.mxu0 0.0
        %936 = vmatprep.subr.mxu0 0.0
        %937 = vmatpush1.msra.mxu0 0.0
        %938 = vmatprep.subr.mxu0 0.0
        %939 = vmatpush1.msra.mxu0 0.0
        %940 = vmatprep.subr.mxu0 0.0
        %941 = vmatpush1.msra.mxu0 0.0
        %942 = vmatprep.subr.mxu0 0.0
        %943 = vmatpush1.msra.mxu0 0.0
        %944 = vmatprep.subr.mxu0 0.0
        %945 = vmatpush1.msra.mxu0 0.0
        %946 = vmatprep.subr.mxu0 0.0
        %947 = vmatpush1.msra.mxu0 0.0
        %948 = vmatprep.subr.mxu0 0.0
        %949 = vmatpush1.msra.mxu0 0.0
        %950 = vmatprep.subr.mxu0 0.0
        %951 = vmatpush1.msra.mxu0 0.0
        %952 = vmatprep.subr.mxu0 0.0
        %953 = vmatpush1.msra.mxu0 0.0
        %954 = vmatprep.subr.mxu0 0.0
        %955 = vmatpush1.msra.mxu0 0.0
        %956 = vmatprep.subr.mxu0 0.0
        %957 = vmatpush1.msra.mxu0 0.0
        %958 = vmatprep.subr.mxu0 0.0
        %959 = vmatpush1.msra.mxu0 0.0
        %960 = vmatprep.subr.mxu0 0.0
        %961 = vmatpush1.msra.mxu0 0.0
        %962 = vmatprep.subr.mxu0 0.0
        %963 = vmatpush1.msra.mxu0 0.0
        %964 = vmatprep.subr.mxu0 0.0
        %965 = vmatpush1.msra.mxu0 0.0
        %966 = vmatprep.subr.mxu0 0.0
        %967 = vmatpush1.msra.mxu0 0.0
        %968 = vmatprep.subr.mxu0 0.0
        %969 = vmatpush1.msra.mxu0 0.0
        %970 = vmatprep.subr.mxu0 0.0
        %971 = vmatpush1.msra.mxu0 0.0
        %972 = vmatprep.subr.mxu0 0.0
        %973 = vmatpush1.msra.mxu0 0.0
        %974 = vmatprep.subr.mxu0 0.0
        %975 = vmatpush1.msra.mxu0 0.0
        %976 = vmatprep.subr.mxu0 0.0
        %977 = vmatpush1.msra.mxu0 0.0
        %978 = vmatprep.subr.mxu0 0.0
        %979 = vmatpush1.msra.mxu0 0.0
        %980 = vmatprep.subr.mxu0 0.0
        %981 = vmatpush1.msra.mxu0 0.0
        %982 = vmatprep.mubr.f32.mxu0 0.0
        %983 = vmatmul.mubr.f32.gmra.mrb[0].mxu0 %v535
        %v984 = vpop.f32.mrb[0].mxu0
        %v985 = vadd.f32 %v275, %v984
        %v986 = vpop.f32.mrb[0].mxu0
        %987 = vmatprep.mubr.f32.mxu0 0.0
        %988 = vmatmul.mubr.f32.gmra.mrb[0].mxu0 %v538
        %v989 = vpop.f32.mrb[0].mxu0
        %v990 = vadd.f32 %v275, %v989
        %v991 = vpop.f32.mrb[0].mxu0
        %992 = vmatprep.mubr.f32.mxu0 0.0
        %993 = vmatmul.mubr.f32.gmra.mrb[0].mxu0 %v541
        %v994 = vpop.f32.mrb[0].mxu0
        %v995 = vadd.f32 %v275, %v994
        %v996 = vpop.f32.mrb[0].mxu0
        %997 = vmatprep.mubr.f32.mxu0 0.0
        %998 = vmatmul.mubr.f32.gmra.mrb[0].mxu0 %v544
        %v999 = vpop.f32.mrb[0].mxu0
        %v1000 = vadd.f32 %v275, %v999
        %v1001 = vpop.f32.mrb[0].mxu0
        %1002 = vmatprep.mubr.f32.mxu0 0.0
        %1003 = vmatmul.mubr.f32.gmra.mrb[0].mxu0 %v547
        %v1004 = vpop.f32.mrb[0].mxu0
        %v1005 = vadd.f32 %v275, %v1004
        %v1006 = vpop.f32.mrb[0].mxu0
        %1007 = vmatprep.mubr.f32.mxu0 0.0
        %1008 = vmatmul.mubr.f32.gmra.mrb[0].mxu0 %v550
        %v1009 = vpop.f32.mrb[0].mxu0
        %v1010 = vadd.f32 %v275, %v1009
        %v1011 = vpop.f32.mrb[0].mxu0
        %1012 = vmatprep.mubr.f32.mxu0 0.0
        %1013 = vmatmul.mubr.f32.gmra.mrb[0].mxu0 %v553
        %v1014 = vpop.f32.mrb[0].mxu0
        %v1015 = vadd.f32 %v275, %v1014
        %v1016 = vpop.f32.mrb[0].mxu0
        %1017 = vmatprep.mubr.f32.mxu0 0.0
        %1018 = vmatmul.mubr.f32.gmra.mrb[0].mxu0 %v556
        %v1019 = vpop.f32.mrb[0].mxu0
        %v1020 = vadd.f32 %v275, %v1019
        %v1021 = vpop.f32.mrb[0].mxu0
        %1022 = vmatprep.mubr.f32.mxu0 0.0
        %1023 = vmatmul.mubr.f32.gmra.mrb[0].mxu0 %v559
        %v1024 = vpop.f32.mrb[0].mxu0
        %v1025 = vadd.f32 %v275, %v1024
        %v1026 = vpop.f32.mrb[0].mxu0
        %1027 = vmatprep.mubr.f32.mxu0 0.0
        %1028 = vmatmul.mubr.f32.gmra.mrb[0].mxu0 %v562
        %v1029 = vpop.f32.mrb[0].mxu0
        %v1030 = vadd.f32 %v275, %v1029
        %v1031 = vpop.f32.mrb[0].mxu0
        %1032 = vmatprep.mubr.f32.mxu0 0.0
        %1033 = vmatmul.mubr.f32.gmra.mrb[0].mxu0 %v565
        %v1034 = vpop.f32.mrb[0].mxu0
        %v1035 = vadd.f32 %v275, %v1034
        %v1036 = vpop.f32.mrb[0].mxu0
        %1037 = vmatprep.mubr.f32.mxu0 0.0
        %1038 = vmatmul.mubr.f32.gmra.mrb[0].mxu0 %v568
        %v1039 = vpop.f32.mrb[0].mxu0
        %v1040 = vadd.f32 %v275, %v1039
        %v1041 = vpop.f32.mrb[0].mxu0
        %1042 = vmatprep.mubr.f32.mxu0 0.0
        %1043 = vmatmul.mubr.f32.gmra.mrb[0].mxu0 %v571
        %v1044 = vpop.f32.mrb[0].mxu0
        %v1045 = vadd.f32 %v275, %v1044
        %v1046 = vpop.f32.mrb[0].mxu0
        %1047 = vmatprep.mubr.f32.mxu0 0.0
        %1048 = vmatmul.mubr.f32.gmra.mrb[0].mxu0 %v574
        %v1049 = vpop.f32.mrb[0].mxu0
        %v1050 = vadd.f32 %v275, %v1049
        %v1051 = vpop.f32.mrb[0].mxu0
        %1052 = vmatprep.mubr.f32.mxu0 0.0
        %1053 = vmatmul.mubr.f32.gmra.mrb[0].mxu0 %v577
        %v1054 = vpop.f32.mrb[0].mxu0
        %v1055 = vadd.f32 %v275, %v1054
        %v1056 = vpop.f32.mrb[0].mxu0
        %1057 = vmatprep.mubr.f32.mxu0 0.0
        %1058 = vmatmul.mubr.f32.gmra.mrb[0].mxu0 %v580
        %v1059 = vpop.f32.mrb[0].mxu0
        %v1060 = vadd.f32 %v275, %v1059
        %v1061 = vpop.f32.mrb[0].mxu0
        %1062 = vmatprep.mubr.f32.mxu0 0.0
        %1063 = vmatmul.mubr.f32.gmra.mrb[0].mxu0 %v583
        %v1064 = vpop.f32.mrb[0].mxu0
        %v1065 = vadd.f32 %v275, %v1064
        %v1066 = vpop.f32.mrb[0].mxu0
        %1067 = vmatprep.mubr.f32.mxu0 0.0
        %1068 = vmatmul.mubr.f32.gmra.mrb[0].mxu0 %v586
        %v1069 = vpop.f32.mrb[0].mxu0
        %v1070 = vadd.f32 %v275, %v1069
        %v1071 = vpop.f32.mrb[0].mxu0
        %1072 = vmatprep.mubr.f32.mxu0 0.0
        %1073 = vmatmul.mubr.f32.gmra.mrb[0].mxu0 %v589
        %v1074 = vpop.f32.mrb[0].mxu0
        %v1075 = vadd.f32 %v275, %v1074
        %v1076 = vpop.f32.mrb[0].mxu0
        %1077 = vmatprep.mubr.f32.mxu0 0.0
        %1078 = vmatmul.mubr.f32.gmra.mrb[0].mxu0 %v592
        %v1079 = vpop.f32.mrb[0].mxu0
        %v1080 = vadd.f32 %v275, %v1079
        %v1081 = vpop.f32.mrb[0].mxu0
        %1082 = vmatprep.mubr.f32.mxu0 0.0
        %1083 = vmatmul.mubr.f32.gmra.mrb[0].mxu0 %v595
        %v1084 = vpop.f32.mrb[0].mxu0
        %v1085 = vadd.f32 %v275, %v1084
        %v1086 = vpop.f32.mrb[0].mxu0
        %1087 = vmatprep.mubr.f32.mxu0 0.0
        %1088 = vmatmul.mubr.f32.gmra.mrb[0].mxu0 %v598
        %v1089 = vpop.f32.mrb[0].mxu0
        %v1090 = vadd.f32 %v275, %v1089
        %v1091 = vpop.f32.mrb[0].mxu0
        %1092 = vmatprep.mubr.f32.mxu0 0.0
        %1093 = vmatmul.mubr.f32.gmra.mrb[0].mxu0 %v601
        %v1094 = vpop.f32.mrb[0].mxu0
        %v1095 = vadd.f32 %v275, %v1094
        %v1096 = vpop.f32.mrb[0].mxu0
        %1097 = vmatprep.mubr.f32.mxu0 0.0
        %1098 = vmatmul.mubr.f32.gmra.mrb[0].mxu0 %v604
        %v1099 = vpop.f32.mrb[0].mxu0
        %v1100 = vadd.f32 %v275, %v1099
        %v1101 = vpop.f32.mrb[0].mxu0
        %1102 = vmatprep.mubr.f32.mxu0 0.0
        %1103 = vmatmul.mubr.f32.gmra.mrb[0].mxu0 %v607
        %v1104 = vpop.f32.mrb[0].mxu0
        %v1105 = vadd.f32 %v275, %v1104
        %v1106 = vpop.f32.mrb[0].mxu0
        %1107 = vmatprep.mubr.f32.mxu0 0.0
        %1108 = vmatmul.mubr.f32.gmra.mrb[0].mxu0 %v610
        %v1109 = vpop.f32.mrb[0].mxu0
        %v1110 = vadd.f32 %v275, %v1109
        %v1111 = vpop.f32.mrb[0].mxu0
        %1112 = vmatprep.mubr.f32.mxu0 0.0
        %1113 = vmatmul.mubr.f32.gmra.mrb[0].mxu0 %v613
        %v1114 = vpop.f32.mrb[0].mxu0
        %v1115 = vadd.f32 %v275, %v1114
        %v1116 = vpop.f32.mrb[0].mxu0
        %1117 = vmatprep.mubr.f32.mxu0 0.0
        %1118 = vmatmul.mubr.f32.gmra.mrb[0].mxu0 %v616
        %v1119 = vpop.f32.mrb[0].mxu0
        %v1120 = vadd.f32 %v275, %v1119
        %v1121 = vpop.f32.mrb[0].mxu0
        %1122 = vmatprep.mubr.f32.mxu0 0.0
        %1123 = vmatmul.mubr.f32.gmra.mrb[0].mxu0 %v619
        %v1124 = vpop.f32.mrb[0].mxu0
        %v1125 = vadd.f32 %v275, %v1124
        %v1126 = vpop.f32.mrb[0].mxu0
        %1127 = vmatprep.mubr.f32.mxu0 0.0
        %1128 = vmatmul.mubr.f32.gmra.mrb[0].mxu0 %v622
        %v1129 = vpop.f32.mrb[0].mxu0
        %v1130 = vadd.f32 %v275, %v1129
        %v1131 = vpop.f32.mrb[0].mxu0
        %1132 = vmatprep.mubr.f32.mxu0 0.0
        %1133 = vmatmul.mubr.f32.gmra.mrb[0].mxu0 %v625
        %v1134 = vpop.f32.mrb[0].mxu0
        %v1135 = vadd.f32 %v275, %v1134
        %v1136 = vpop.f32.mrb[0].mxu0
        %1137 = vmatprep.mubr.f32.mxu0 0.0
        %1138 = vmatmul.mubr.f32.gmra.mrb[0].mxu0 %v628
        %v1139 = vpop.f32.mrb[0].mxu0
        %v1140 = vadd.f32 %v275, %v1139
        %v1141 = vpop.f32.mrb[0].mxu0
        %1142 = vmatprep.mubr.f32.mxu0 0.0
        %1143 = vmatmul.mubr.f32.gmra.mrb[0].mxu0 %v631
        %v1144 = vpop.f32.mrb[0].mxu0
        %v1145 = vadd.f32 %v275, %v1144
        %v1146 = vpop.f32.mrb[0].mxu0
        %1147 = vmatprep.mubr.f32.mxu0 0.0
        %1148 = vmatmul.mubr.f32.gmra.mrb[0].mxu0 %v634
        %v1149 = vpop.f32.mrb[0].mxu0
        %v1150 = vadd.f32 %v275, %v1149
        %v1151 = vpop.f32.mrb[0].mxu0
        %1152 = vmatprep.mubr.f32.mxu0 0.0
        %1153 = vmatmul.mubr.f32.gmra.mrb[0].mxu0 %v637
        %v1154 = vpop.f32.mrb[0].mxu0
        %v1155 = vadd.f32 %v275, %v1154
        %v1156 = vpop.f32.mrb[0].mxu0
        %1157 = vmatprep.mubr.f32.mxu0 0.0
        %1158 = vmatmul.mubr.f32.gmra.mrb[0].mxu0 %v640
        %v1159 = vpop.f32.mrb[0].mxu0
        %v1160 = vadd.f32 %v275, %v1159
        %v1161 = vpop.f32.mrb[0].mxu0
        %1162 = vmatprep.mubr.f32.mxu0 0.0
        %1163 = vmatmul.mubr.f32.gmra.mrb[0].mxu0 %v643
        %v1164 = vpop.f32.mrb[0].mxu0
        %v1165 = vadd.f32 %v275, %v1164
        %v1166 = vpop.f32.mrb[0].mxu0
        %1167 = vmatprep.mubr.f32.mxu0 0.0
        %1168 = vmatmul.mubr.f32.gmra.mrb[0].mxu0 %v646
        %v1169 = vpop.f32.mrb[0].mxu0
        %v1170 = vadd.f32 %v275, %v1169
        %v1171 = vpop.f32.mrb[0].mxu0
        %1172 = vmatprep.mubr.f32.mxu0 0.0
        %1173 = vmatmul.mubr.f32.gmra.mrb[0].mxu0 %v649
        %v1174 = vpop.f32.mrb[0].mxu0
        %v1175 = vadd.f32 %v275, %v1174
        %v1176 = vpop.f32.mrb[0].mxu0
        %1177 = vmatprep.mubr.f32.mxu0 0.0
        %1178 = vmatmul.mubr.f32.gmra.mrb[0].mxu0 %v652
        %v1179 = vpop.f32.mrb[0].mxu0
        %v1180 = vadd.f32 %v275, %v1179
        %v1181 = vpop.f32.mrb[0].mxu0
        %1182 = vmatprep.mubr.f32.mxu0 0.0
        %1183 = vmatmul.mubr.f32.gmra.mrb[0].mxu0 %v655
        %v1184 = vpop.f32.mrb[0].mxu0
        %v1185 = vadd.f32 %v275, %v1184
        %v1186 = vpop.f32.mrb[0].mxu0
        %1187 = vmatprep.mubr.f32.mxu0 0.0
        %1188 = vmatmul.mubr.f32.gmra.mrb[0].mxu0 %v658
        %v1189 = vpop.f32.mrb[0].mxu0
        %v1190 = vadd.f32 %v275, %v1189
        %v1191 = vpop.f32.mrb[0].mxu0
        %1192 = vmatprep.mubr.f32.mxu0 0.0
        %1193 = vmatmul.mubr.f32.gmra.mrb[0].mxu0 %v661
        %v1194 = vpop.f32.mrb[0].mxu0
        %v1195 = vadd.f32 %v275, %v1194
        %v1196 = vpop.f32.mrb[0].mxu0
        %1197 = vmatprep.mubr.f32.mxu0 0.0
        %1198 = vmatmul.mubr.f32.gmra.mrb[0].mxu0 %v664
        %v1199 = vpop.f32.mrb[0].mxu0
        %v1200 = vadd.f32 %v275, %v1199
        %v1201 = vpop.f32.mrb[0].mxu0
        %1202 = vmatprep.mubr.f32.mxu0 0.0
        %1203 = vmatmul.mubr.f32.gmra.mrb[0].mxu0 %v667
        %v1204 = vpop.f32.mrb[0].mxu0
        %v1205 = vadd.f32 %v275, %v1204
        %v1206 = vpop.f32.mrb[0].mxu0
        %1207 = vmatprep.mubr.f32.mxu0 0.0
        %1208 = vmatmul.mubr.f32.gmra.mrb[0].mxu0 %v670
        %v1209 = vpop.f32.mrb[0].mxu0
        %v1210 = vadd.f32 %v275, %v1209
        %v1211 = vpop.f32.mrb[0].mxu0
        %1212 = vmatprep.mubr.f32.mxu0 0.0
        %1213 = vmatmul.mubr.f32.gmra.mrb[0].mxu0 %v673
        %v1214 = vpop.f32.mrb[0].mxu0
        %v1215 = vadd.f32 %v275, %v1214
        %v1216 = vpop.f32.mrb[0].mxu0
        %1217 = vmatprep.mubr.f32.mxu0 0.0
        %1218 = vmatmul.mubr.f32.gmra.mrb[0].mxu0 %v676
        %v1219 = vpop.f32.mrb[0].mxu0
        %v1220 = vadd.f32 %v275, %v1219
        %v1221 = vpop.f32.mrb[0].mxu0
        %1222 = vmatprep.mubr.f32.mxu0 0.0
        %1223 = vmatmul.mubr.f32.gmra.mrb[0].mxu0 %v679
        %v1224 = vpop.f32.mrb[0].mxu0
        %v1225 = vadd.f32 %v275, %v1224
        %v1226 = vpop.f32.mrb[0].mxu0
        %1227 = vmatprep.mubr.f32.mxu0 0.0
        %1228 = vmatmul.mubr.f32.gmra.mrb[0].mxu0 %v682
        %v1229 = vpop.f32.mrb[0].mxu0
        %v1230 = vadd.f32 %v275, %v1229
        %v1231 = vpop.f32.mrb[0].mxu0
        %1232 = vmatprep.mubr.f32.mxu0 0.0
        %1233 = vmatmul.mubr.f32.gmra.mrb[0].mxu0 %v685
        %v1234 = vpop.f32.mrb[0].mxu0
        %v1235 = vadd.f32 %v275, %v1234
        %v1236 = vpop.f32.mrb[0].mxu0
        %1237 = vmatprep.mubr.f32.mxu0 0.0
        %1238 = vmatmul.mubr.f32.gmra.mrb[0].mxu0 %v688
        %v1239 = vpop.f32.mrb[0].mxu0
        %v1240 = vadd.f32 %v275, %v1239
        %v1241 = vpop.f32.mrb[0].mxu0
        %1242 = vmatprep.mubr.f32.mxu0 0.0
        %1243 = vmatmul.mubr.f32.gmra.mrb[0].mxu0 %v691
        %v1244 = vpop.f32.mrb[0].mxu0
        %v1245 = vadd.f32 %v275, %v1244
        %v1246 = vpop.f32.mrb[0].mxu0
        %1247 = vmatprep.mubr.f32.mxu0 0.0
        %1248 = vmatmul.mubr.f32.gmra.mrb[0].mxu0 %v694
        %v1249 = vpop.f32.mrb[0].mxu0
        %v1250 = vadd.f32 %v275, %v1249
        %v1251 = vpop.f32.mrb[0].mxu0
        %1252 = vmatprep.mubr.f32.mxu0 0.0
        %1253 = vmatmul.mubr.f32.gmra.mrb[0].mxu0 %v697
        %v1254 = vpop.f32.mrb[0].mxu0
        %v1255 = vadd.f32 %v275, %v1254
        %v1256 = vpop.f32.mrb[0].mxu0
        %1257 = vmatprep.mubr.f32.mxu0 0.0
        %1258 = vmatmul.mubr.f32.gmra.mrb[0].mxu0 %v700
        %v1259 = vpop.f32.mrb[0].mxu0
        %v1260 = vadd.f32 %v275, %v1259
        %v1261 = vpop.f32.mrb[0].mxu0
        %1262 = vmatprep.mubr.f32.mxu0 0.0
        %1263 = vmatmul.mubr.f32.gmra.mrb[0].mxu0 %v703
        %v1264 = vpop.f32.mrb[0].mxu0
        %v1265 = vadd.f32 %v275, %v1264
        %v1266 = vpop.f32.mrb[0].mxu0
        %1267 = vmatprep.mubr.f32.mxu0 0.0
        %1268 = vmatmul.mubr.f32.gmra.mrb[0].mxu0 %v706
        %v1269 = vpop.f32.mrb[0].mxu0
        %v1270 = vadd.f32 %v275, %v1269
        %v1271 = vpop.f32.mrb[0].mxu0
        %1272 = vmatprep.mubr.f32.mxu0 0.0
        %1273 = vmatmul.mubr.f32.gmra.mrb[0].mxu0 %v709
        %v1274 = vpop.f32.mrb[0].mxu0
        %v1275 = vadd.f32 %v275, %v1274
        %v1276 = vpop.f32.mrb[0].mxu0
        %1277 = vmatprep.mubr.f32.mxu0 0.0
        %1278 = vmatmul.mubr.f32.gmra.mrb[0].mxu0 %v712
        %v1279 = vpop.f32.mrb[0].mxu0
        %v1280 = vadd.f32 %v275, %v1279
        %v1281 = vpop.f32.mrb[0].mxu0
        %1282 = vmatprep.mubr.f32.mxu0 0.0
        %1283 = vmatmul.mubr.f32.gmra.mrb[0].mxu0 %v715
        %v1284 = vpop.f32.mrb[0].mxu0
        %v1285 = vadd.f32 %v275, %v1284
        %v1286 = vpop.f32.mrb[0].mxu0
        %1287 = vmatprep.mubr.f32.mxu0 0.0
        %1288 = vmatmul.mubr.f32.gmra.mrb[0].mxu0 %v718
        %v1289 = vpop.f32.mrb[0].mxu0
        %v1290 = vadd.f32 %v275, %v1289
        %v1291 = vpop.f32.mrb[0].mxu0
        %1292 = vmatprep.mubr.f32.mxu0 0.0
        %1293 = vmatmul.mubr.f32.gmra.mrb[0].mxu0 %v721
        %v1294 = vpop.f32.mrb[0].mxu0
        %v1295 = vadd.f32 %v275, %v1294
        %v1296 = vpop.f32.mrb[0].mxu0
        %1297 = vmatprep.mubr.f32.mxu0 0.0
        %1298 = vmatmul.mubr.f32.gmra.mrb[0].mxu0 %v724
        %v1299 = vpop.f32.mrb[0].mxu0
        %v1300 = vadd.f32 %v275, %v1299
        %v1301 = vpop.f32.mrb[0].mxu0
        %1302 = vmatprep.mubr.f32.mxu0 0.0
        %1303 = vmatmul.mubr.f32.gmra.mrb[0].mxu0 %v727
        %v1304 = vpop.f32.mrb[0].mxu0
        %v1305 = vadd.f32 %v275, %v1304
        %v1306 = vpop.f32.mrb[0].mxu0
        %1307 = vmatprep.mubr.f32.mxu0 0.0
        %1308 = vmatmul.mubr.f32.gmra.mrb[0].mxu0 %v730
        %v1309 = vpop.f32.mrb[0].mxu0
        %v1310 = vadd.f32 %v275, %v1309
        %v1311 = vpop.f32.mrb[0].mxu0
        %1312 = vmatprep.mubr.f32.mxu0 0.0
        %1313 = vmatmul.mubr.f32.gmra.mrb[0].mxu0 %v733
        %v1314 = vpop.f32.mrb[0].mxu0
        %v1315 = vadd.f32 %v275, %v1314
        %v1316 = vpop.f32.mrb[0].mxu0
        %1317 = vmatprep.mubr.f32.mxu0 0.0
        %1318 = vmatmul.mubr.f32.gmra.mrb[0].mxu0 %v736
        %v1319 = vpop.f32.mrb[0].mxu0
        %v1320 = vadd.f32 %v275, %v1319
        %v1321 = vpop.f32.mrb[0].mxu0
        %1322 = vmatprep.mubr.f32.mxu0 0.0
        %1323 = vmatmul.mubr.f32.gmra.mrb[0].mxu0 %v739
        %v1324 = vpop.f32.mrb[0].mxu0
        %v1325 = vadd.f32 %v275, %v1324
        %v1326 = vpop.f32.mrb[0].mxu0
        %1327 = vmatprep.mubr.f32.mxu0 0.0
        %1328 = vmatmul.mubr.f32.gmra.mrb[0].mxu0 %v742
        %v1329 = vpop.f32.mrb[0].mxu0
        %v1330 = vadd.f32 %v275, %v1329
        %v1331 = vpop.f32.mrb[0].mxu0
        %1332 = vmatprep.mubr.f32.mxu0 0.0
        %1333 = vmatmul.mubr.f32.gmra.mrb[0].mxu0 %v745
        %v1334 = vpop.f32.mrb[0].mxu0
        %v1335 = vadd.f32 %v275, %v1334
        %v1336 = vpop.f32.mrb[0].mxu0
        %1337 = vmatprep.mubr.f32.mxu0 0.0
        %1338 = vmatmul.mubr.f32.gmra.mrb[0].mxu0 %v748
        %v1339 = vpop.f32.mrb[0].mxu0
        %v1340 = vadd.f32 %v275, %v1339
        %v1341 = vpop.f32.mrb[0].mxu0
        %1342 = vmatprep.mubr.f32.mxu0 0.0
        %1343 = vmatmul.mubr.f32.gmra.mrb[0].mxu0 %v751
        %v1344 = vpop.f32.mrb[0].mxu0
        %v1345 = vadd.f32 %v275, %v1344
        %v1346 = vpop.f32.mrb[0].mxu0
        %1347 = vmatprep.mubr.f32.mxu0 0.0
        %1348 = vmatmul.mubr.f32.gmra.mrb[0].mxu0 %v754
        %v1349 = vpop.f32.mrb[0].mxu0
        %v1350 = vadd.f32 %v275, %v1349
        %v1351 = vpop.f32.mrb[0].mxu0
        %1352 = vmatprep.mubr.f32.mxu0 0.0
        %1353 = vmatmul.mubr.f32.gmra.mrb[0].mxu0 %v757
        %v1354 = vpop.f32.mrb[0].mxu0
        %v1355 = vadd.f32 %v275, %v1354
        %v1356 = vpop.f32.mrb[0].mxu0
        %1357 = vmatprep.mubr.f32.mxu0 0.0
        %1358 = vmatmul.mubr.f32.gmra.mrb[0].mxu0 %v760
        %v1359 = vpop.f32.mrb[0].mxu0
        %v1360 = vadd.f32 %v275, %v1359
        %v1361 = vpop.f32.mrb[0].mxu0
        %1362 = vmatprep.mubr.f32.mxu0 0.0
        %1363 = vmatmul.mubr.f32.gmra.mrb[0].mxu0 %v763
        %v1364 = vpop.f32.mrb[0].mxu0
        %v1365 = vadd.f32 %v275, %v1364
        %v1366 = vpop.f32.mrb[0].mxu0
        %1367 = vmatprep.mubr.f32.mxu0 0.0
        %1368 = vmatmul.mubr.f32.gmra.mrb[0].mxu0 %v766
        %v1369 = vpop.f32.mrb[0].mxu0
        %v1370 = vadd.f32 %v275, %v1369
        %v1371 = vpop.f32.mrb[0].mxu0
        %1372 = vmatprep.mubr.f32.mxu0 0.0
        %1373 = vmatmul.mubr.f32.gmra.mrb[0].mxu0 %v769
        %v1374 = vpop.f32.mrb[0].mxu0
        %v1375 = vadd.f32 %v275, %v1374
        %v1376 = vpop.f32.mrb[0].mxu0
        %1377 = vmatprep.mubr.f32.mxu0 0.0
        %1378 = vmatmul.mubr.f32.gmra.mrb[0].mxu0 %v772
        %v1379 = vpop.f32.mrb[0].mxu0
        %v1380 = vadd.f32 %v275, %v1379
        %v1381 = vpop.f32.mrb[0].mxu0
        %1382 = vmatprep.mubr.f32.mxu0 0.0
        %1383 = vmatmul.mubr.f32.gmra.mrb[0].mxu0 %v775
        %v1384 = vpop.f32.mrb[0].mxu0
        %v1385 = vadd.f32 %v275, %v1384
        %v1386 = vpop.f32.mrb[0].mxu0
        %1387 = vmatprep.mubr.f32.mxu0 0.0
        %1388 = vmatmul.mubr.f32.gmra.mrb[0].mxu0 %v778
        %v1389 = vpop.f32.mrb[0].mxu0
        %v1390 = vadd.f32 %v275, %v1389
        %v1391 = vpop.f32.mrb[0].mxu0
        %1392 = vmatprep.mubr.f32.mxu0 0.0
        %1393 = vmatmul.mubr.f32.gmra.mrb[0].mxu0 %v781
        %v1394 = vpop.f32.mrb[0].mxu0
        %v1395 = vadd.f32 %v275, %v1394
        %v1396 = vpop.f32.mrb[0].mxu0
        %1397 = vmatprep.mubr.f32.mxu0 0.0
        %1398 = vmatmul.mubr.f32.gmra.mrb[0].mxu0 %v784
        %v1399 = vpop.f32.mrb[0].mxu0
        %v1400 = vadd.f32 %v275, %v1399
        %v1401 = vpop.f32.mrb[0].mxu0
        %1402 = vmatprep.mubr.f32.mxu0 0.0
        %1403 = vmatmul.mubr.f32.gmra.mrb[0].mxu0 %v787
        %v1404 = vpop.f32.mrb[0].mxu0
        %v1405 = vadd.f32 %v275, %v1404
        %v1406 = vpop.f32.mrb[0].mxu0
        %1407 = vmatprep.mubr.f32.mxu0 0.0
        %1408 = vmatmul.mubr.f32.gmra.mrb[0].mxu0 %v790
        %v1409 = vpop.f32.mrb[0].mxu0
        %v1410 = vadd.f32 %v275, %v1409
        %v1411 = vpop.f32.mrb[0].mxu0
        %1412 = vmatprep.mubr.f32.mxu0 0.0
        %1413 = vmatmul.mubr.f32.gmra.mrb[0].mxu0 %v793
        %v1414 = vpop.f32.mrb[0].mxu0
        %v1415 = vadd.f32 %v275, %v1414
        %v1416 = vpop.f32.mrb[0].mxu0
        %1417 = vmatprep.mubr.f32.mxu0 0.0
        %1418 = vmatmul.mubr.f32.gmra.mrb[0].mxu0 %v796
        %v1419 = vpop.f32.mrb[0].mxu0
        %v1420 = vadd.f32 %v275, %v1419
        %v1421 = vpop.f32.mrb[0].mxu0
        %1422 = vmatprep.mubr.f32.mxu0 0.0
        %1423 = vmatmul.mubr.f32.gmra.mrb[0].mxu0 %v799
        %v1424 = vpop.f32.mrb[0].mxu0
        %v1425 = vadd.f32 %v275, %v1424
        %v1426 = vpop.f32.mrb[0].mxu0
        %1427 = vmatprep.mubr.f32.mxu0 0.0
        %1428 = vmatmul.mubr.f32.gmra.mrb[0].mxu0 %v802
        %v1429 = vpop.f32.mrb[0].mxu0
        %v1430 = vadd.f32 %v275, %v1429
        %v1431 = vpop.f32.mrb[0].mxu0
        %1432 = vmatprep.mubr.f32.mxu0 0.0
        %1433 = vmatmul.mubr.f32.gmra.mrb[0].mxu0 %v805
        %v1434 = vpop.f32.mrb[0].mxu0
        %v1435 = vadd.f32 %v275, %v1434
        %v1436 = vpop.f32.mrb[0].mxu0
        %1437 = vmatprep.mubr.f32.mxu0 0.0
        %1438 = vmatmul.mubr.f32.gmra.mrb[0].mxu0 %v808
        %v1439 = vpop.f32.mrb[0].mxu0
        %v1440 = vadd.f32 %v275, %v1439
        %v1441 = vpop.f32.mrb[0].mxu0
        %1442 = vmatprep.mubr.f32.mxu0 0.0
        %1443 = vmatmul.mubr.f32.gmra.mrb[0].mxu0 %v811
        %v1444 = vpop.f32.mrb[0].mxu0
        %v1445 = vadd.f32 %v275, %v1444
        %v1446 = vpop.f32.mrb[0].mxu0
        %1447 = vmatprep.mubr.f32.mxu0 0.0
        %1448 = vmatmul.mubr.f32.gmra.mrb[0].mxu0 %v814
        %v1449 = vpop.f32.mrb[0].mxu0
        %v1450 = vadd.f32 %v275, %v1449
        %v1451 = vpop.f32.mrb[0].mxu0
        %1452 = vmatprep.mubr.f32.mxu0 0.0
        %1453 = vmatmul.mubr.f32.gmra.mrb[0].mxu0 %v817
        %v1454 = vpop.f32.mrb[0].mxu0
        %v1455 = vadd.f32 %v275, %v1454
        %v1456 = vpop.f32.mrb[0].mxu0
        %1457 = vmatprep.mubr.f32.mxu0 0.0
        %1458 = vmatmul.mubr.f32.gmra.mrb[0].mxu0 %v820
        %v1459 = vpop.f32.mrb[0].mxu0
        %v1460 = vadd.f32 %v275, %v1459
        %v1461 = vpop.f32.mrb[0].mxu0
        %1462 = vmatprep.mubr.f32.mxu0 0.0
        %1463 = vmatmul.mubr.f32.gmra.mrb[0].mxu0 %v823
        %v1464 = vpop.f32.mrb[0].mxu0
        %v1465 = vadd.f32 %v275, %v1464
        %v1466 = vpop.f32.mrb[0].mxu0
        %1467 = vmatprep.mubr.f32.mxu0 0.0
        %1468 = vmatmul.mubr.f32.gmra.mrb[0].mxu0 %v826
        %v1469 = vpop.f32.mrb[0].mxu0
        %v1470 = vadd.f32 %v275, %v1469
        %v1471 = vpop.f32.mrb[0].mxu0
        %1472 = vmatprep.mubr.f32.mxu0 0.0
        %1473 = vmatmul.mubr.f32.gmra.mrb[0].mxu0 %v829
        %v1474 = vpop.f32.mrb[0].mxu0
        %v1475 = vadd.f32 %v275, %v1474
        %v1476 = vpop.f32.mrb[0].mxu0
        %1477 = vmatprep.mubr.f32.mxu0 0.0
        %1478 = vmatmul.mubr.f32.gmra.mrb[0].mxu0 %v832
        %v1479 = vpop.f32.mrb[0].mxu0
        %v1480 = vadd.f32 %v275, %v1479
        %v1481 = vpop.f32.mrb[0].mxu0
        %1482 = vmatprep.mubr.f32.mxu0 0.0
        %1483 = vmatmul.mubr.f32.gmra.mrb[0].mxu0 %v835
        %v1484 = vpop.f32.mrb[0].mxu0
        %v1485 = vadd.f32 %v275, %v1484
        %v1486 = vpop.f32.mrb[0].mxu0
        %1487 = vmatprep.mubr.f32.mxu0 0.0
        %1488 = vmatmul.mubr.f32.gmra.mrb[0].mxu0 %v838
        %v1489 = vpop.f32.mrb[0].mxu0
        %v1490 = vadd.f32 %v275, %v1489
        %v1491 = vpop.f32.mrb[0].mxu0
        %1492 = vmatprep.mubr.f32.mxu0 0.0
        %1493 = vmatmul.mubr.f32.gmra.mrb[0].mxu0 %v841
        %v1494 = vpop.f32.mrb[0].mxu0
        %v1495 = vadd.f32 %v275, %v1494
        %v1496 = vpop.f32.mrb[0].mxu0
        %1497 = vmatprep.mubr.f32.mxu0 0.0
        %1498 = vmatmul.mubr.f32.gmra.mrb[0].mxu0 %v844
        %v1499 = vpop.f32.mrb[0].mxu0
        %v1500 = vadd.f32 %v275, %v1499
        %v1501 = vpop.f32.mrb[0].mxu0
        %1502 = vmatprep.mubr.f32.mxu0 0.0
        %1503 = vmatmul.mubr.f32.gmra.mrb[0].mxu0 %v847
        %v1504 = vpop.f32.mrb[0].mxu0
        %v1505 = vadd.f32 %v275, %v1504
        %v1506 = vpop.f32.mrb[0].mxu0
        %1507 = vmatprep.mubr.f32.mxu0 0.0
        %1508 = vmatmul.mubr.f32.gmra.mrb[0].mxu0 %v850
        %v1509 = vpop.f32.mrb[0].mxu0
        %v1510 = vadd.f32 %v275, %v1509
        %v1511 = vpop.f32.mrb[0].mxu0
        %1512 = vmatprep.mubr.f32.mxu0 0.0
        %1513 = vmatmul.mubr.f32.gmra.mrb[0].mxu0 %v853
        %v1514 = vpop.f32.mrb[0].mxu0
        %v1515 = vadd.f32 %v275, %v1514
        %v1516 = vpop.f32.mrb[0].mxu0
        %1517 = vmatprep.mubr.f32.mxu0 0.0
        %1518 = vmatmul.mubr.f32.gmra.mrb[0].mxu0 %v856
        %v1519 = vpop.f32.mrb[0].mxu0
        %v1520 = vadd.f32 %v275, %v1519
        %v1521 = vpop.f32.mrb[0].mxu0
        %1522 = vmatprep.mubr.f32.mxu0 0.0
        %1523 = vmatmul.mubr.f32.gmra.mrb[0].mxu0 %v859
        %v1524 = vpop.f32.mrb[0].mxu0
        %v1525 = vadd.f32 %v275, %v1524
        %v1526 = vpop.f32.mrb[0].mxu0
        %1527 = vmatprep.mubr.f32.mxu0 0.0
        %1528 = vmatmul.mubr.f32.gmra.mrb[0].mxu0 %v862
        %v1529 = vpop.f32.mrb[0].mxu0
        %v1530 = vadd.f32 %v275, %v1529
        %v1531 = vpop.f32.mrb[0].mxu0
        %1532 = vmatprep.mubr.f32.mxu0 0.0
        %1533 = vmatmul.mubr.f32.gmra.mrb[0].mxu0 %v865
        %v1534 = vpop.f32.mrb[0].mxu0
        %v1535 = vadd.f32 %v275, %v1534
        %v1536 = vpop.f32.mrb[0].mxu0
        %1537 = vmatprep.mubr.f32.mxu0 0.0
        %1538 = vmatmul.mubr.f32.gmra.mrb[0].mxu0 %v868
        %v1539 = vpop.f32.mrb[0].mxu0
        %v1540 = vadd.f32 %v275, %v1539
        %v1541 = vpop.f32.mrb[0].mxu0
        %1542 = vmatprep.mubr.f32.mxu0 0.0
        %1543 = vmatmul.mubr.f32.gmra.mrb[0].mxu0 %v871
        %v1544 = vpop.f32.mrb[0].mxu0
        %v1545 = vadd.f32 %v275, %v1544
        %v1546 = vpop.f32.mrb[0].mxu0
        %1547 = vmatprep.mubr.f32.mxu0 0.0
        %1548 = vmatmul.mubr.f32.gmra.mrb[0].mxu0 %v874
        %v1549 = vpop.f32.mrb[0].mxu0
        %v1550 = vadd.f32 %v275, %v1549
        %v1551 = vpop.f32.mrb[0].mxu0
        %1552 = vmatprep.mubr.f32.mxu0 0.0
        %1553 = vmatmul.mubr.f32.gmra.mrb[0].mxu0 %v877
        %v1554 = vpop.f32.mrb[0].mxu0
        %v1555 = vadd.f32 %v275, %v1554
        %v1556 = vpop.f32.mrb[0].mxu0
        %1557 = vmatprep.mubr.f32.mxu0 0.0
        %1558 = vmatmul.mubr.f32.gmra.mrb[0].mxu0 %v880
        %v1559 = vpop.f32.mrb[0].mxu0
        %v1560 = vadd.f32 %v275, %v1559
        %v1561 = vpop.f32.mrb[0].mxu0
        %1562 = vmatprep.mubr.f32.mxu0 0.0
        %1563 = vmatmul.mubr.f32.gmra.mrb[0].mxu0 %v883
        %v1564 = vpop.f32.mrb[0].mxu0
        %v1565 = vadd.f32 %v275, %v1564
        %v1566 = vpop.f32.mrb[0].mxu0
        %1567 = vmatprep.mubr.f32.mxu0 0.0
        %1568 = vmatmul.mubr.f32.gmra.mrb[0].mxu0 %v886
        %v1569 = vpop.f32.mrb[0].mxu0
        %v1570 = vadd.f32 %v275, %v1569
        %v1571 = vpop.f32.mrb[0].mxu0
        %1572 = vmatprep.mubr.f32.mxu0 0.0
        %1573 = vmatmul.mubr.f32.gmra.mrb[0].mxu0 %v889
        %v1574 = vpop.f32.mrb[0].mxu0
        %v1575 = vadd.f32 %v275, %v1574
        %v1576 = vpop.f32.mrb[0].mxu0
        %1577 = vmatprep.mubr.f32.mxu0 0.0
        %1578 = vmatmul.mubr.f32.gmra.mrb[0].mxu0 %v892
        %v1579 = vpop.f32.mrb[0].mxu0
        %v1580 = vadd.f32 %v275, %v1579
        %v1581 = vpop.f32.mrb[0].mxu0
        %1582 = vmatprep.mubr.f32.mxu0 0.0
        %1583 = vmatmul.mubr.f32.gmra.mrb[0].mxu0 %v895
        %v1584 = vpop.f32.mrb[0].mxu0
        %v1585 = vadd.f32 %v275, %v1584
        %v1586 = vpop.f32.mrb[0].mxu0
        %1587 = vmatprep.mubr.f32.mxu0 0.0
        %1588 = vmatmul.mubr.f32.gmra.mrb[0].mxu0 %v898
        %v1589 = vpop.f32.mrb[0].mxu0
        %v1590 = vadd.f32 %v275, %v1589
        %v1591 = vpop.f32.mrb[0].mxu0
        %1592 = vmatprep.mubr.f32.mxu0 0.0
        %1593 = vmatmul.mubr.f32.gmra.mrb[0].mxu0 %v901
        %v1594 = vpop.f32.mrb[0].mxu0
        %v1595 = vadd.f32 %v275, %v1594
        %v1596 = vpop.f32.mrb[0].mxu0
        %1597 = vmatprep.mubr.f32.mxu0 0.0
        %1598 = vmatmul.mubr.f32.gmra.mrb[0].mxu0 %v904
        %v1599 = vpop.f32.mrb[0].mxu0
        %v1600 = vadd.f32 %v275, %v1599
        %v1601 = vpop.f32.mrb[0].mxu0
        %1602 = vmatprep.mubr.f32.mxu0 0.0
        %1603 = vmatmul.mubr.f32.gmra.mrb[0].mxu0 %v907
        %v1604 = vpop.f32.mrb[0].mxu0
        %v1605 = vadd.f32 %v275, %v1604
        %v1606 = vpop.f32.mrb[0].mxu0
        %1607 = vmatprep.mubr.f32.mxu0 0.0
        %1608 = vmatmul.mubr.f32.gmra.mrb[0].mxu0 %v910
        %v1609 = vpop.f32.mrb[0].mxu0
        %v1610 = vadd.f32 %v275, %v1609
        %v1611 = vpop.f32.mrb[0].mxu0
        %1612 = vmatprep.mubr.f32.mxu0 0.0
        %1613 = vmatmul.mubr.f32.gmra.mrb[0].mxu0 %v913
        %v1614 = vpop.f32.mrb[0].mxu0
        %v1615 = vadd.f32 %v275, %v1614
        %v1616 = vpop.f32.mrb[0].mxu0
        %1617 = vmatprep.mubr.f32.mxu0 0.0
        %1618 = vmatmul.mubr.f32.gmra.mrb[0].mxu0 %v916
        %v1619 = vpop.f32.mrb[0].mxu0
        %v1620 = vadd.f32 %v275, %v1619
        %v1621 = vpop.f32.mrb[0].mxu0
        %1622 = vdwg.mxu0
        %vm1623 = vcmask 244736
        %1624 = vst.msk [vmem:[%s232] sm:$0xff] %vm1623, %v985
        %1625 = vst.msk [vmem:[%s232 + $0x8] sm:$0xff] %vm1623, %v990
        %1626 = vst.msk [vmem:[%s232 + $0x10] sm:$0xff] %vm1623, %v995
        %1627 = vst.msk [vmem:[%s232 + $0x18] sm:$0xff] %vm1623, %v1000
        %1628 = vst.msk [vmem:[%s232 + $0x20] sm:$0xff] %vm1623, %v1005
        %1629 = vst.msk [vmem:[%s232 + $0x28] sm:$0xff] %vm1623, %v1010
        %1630 = vst.msk [vmem:[%s232 + $0x30] sm:$0xff] %vm1623, %v1015
        %1631 = vst.msk [vmem:[%s232 + $0x38] sm:$0xff] %vm1623, %v1020
        %1632 = vst.msk [vmem:[%s232 + $0x40] sm:$0xff] %vm1623, %v1025
        %1633 = vst.msk [vmem:[%s232 + $0x48] sm:$0xff] %vm1623, %v1030
        %1634 = vst.msk [vmem:[%s232 + $0x50] sm:$0xff] %vm1623, %v1035
        %1635 = vst.msk [vmem:[%s232 + $0x58] sm:$0xff] %vm1623, %v1040
        %1636 = vst.msk [vmem:[%s232 + $0x60] sm:$0xff] %vm1623, %v1045
        %1637 = vst.msk [vmem:[%s232 + $0x68] sm:$0xff] %vm1623, %v1050
        %1638 = vst.msk [vmem:[%s232 + $0x70] sm:$0xff] %vm1623, %v1055
        %1639 = vst.msk [vmem:[%s232 + $0x78] sm:$0xff] %vm1623, %v1060
        %1640 = vst.msk [vmem:[%s232 + $0x80] sm:$0xff] %vm1623, %v1065
        %1641 = vst.msk [vmem:[%s232 + $0x88] sm:$0xff] %vm1623, %v1070
        %1642 = vst.msk [vmem:[%s232 + $0x90] sm:$0xff] %vm1623, %v1075
        %1643 = vst.msk [vmem:[%s232 + $0x98] sm:$0xff] %vm1623, %v1080
        %1644 = vst.msk [vmem:[%s232 + $0xa0] sm:$0xff] %vm1623, %v1085
        %1645 = vst.msk [vmem:[%s232 + $0xa8] sm:$0xff] %vm1623, %v1090
        %1646 = vst.msk [vmem:[%s232 + $0xb0] sm:$0xff] %vm1623, %v1095
        %1647 = vst.msk [vmem:[%s232 + $0xb8] sm:$0xff] %vm1623, %v1100
        %1648 = vst.msk [vmem:[%s232 + $0xc0] sm:$0xff] %vm1623, %v1105
        %1649 = vst.msk [vmem:[%s232 + $0xc8] sm:$0xff] %vm1623, %v1110
        %1650 = vst.msk [vmem:[%s232 + $0xd0] sm:$0xff] %vm1623, %v1115
        %1651 = vst.msk [vmem:[%s232 + $0xd8] sm:$0xff] %vm1623, %v1120
        %1652 = vst.msk [vmem:[%s232 + $0xe0] sm:$0xff] %vm1623, %v1125
        %1653 = vst.msk [vmem:[%s232 + $0xe8] sm:$0xff] %vm1623, %v1130
        %1654 = vst.msk [vmem:[%s232 + $0xf0] sm:$0xff] %vm1623, %v1135
        %1655 = vst.msk [vmem:[%s232 + $0xf8] sm:$0xff] %vm1623, %v1140
        %1656 = vst.msk [vmem:[%s232 + $0x100] sm:$0xff] %vm1623, %v1145
        %1657 = vst.msk [vmem:[%s232 + $0x108] sm:$0xff] %vm1623, %v1150
        %1658 = vst.msk [vmem:[%s232 + $0x110] sm:$0xff] %vm1623, %v1155
        %1659 = vst.msk [vmem:[%s232 + $0x118] sm:$0xff] %vm1623, %v1160
        %1660 = vst.msk [vmem:[%s232 + $0x120] sm:$0xff] %vm1623, %v1165
        %1661 = vst.msk [vmem:[%s232 + $0x128] sm:$0xff] %vm1623, %v1170
        %1662 = vst.msk [vmem:[%s232 + $0x130] sm:$0xff] %vm1623, %v1175
        %1663 = vst.msk [vmem:[%s232 + $0x138] sm:$0xff] %vm1623, %v1180
        %1664 = vst.msk [vmem:[%s232 + $0x140] sm:$0xff] %vm1623, %v1185
        %1665 = vst.msk [vmem:[%s232 + $0x148] sm:$0xff] %vm1623, %v1190
        %1666 = vst.msk [vmem:[%s232 + $0x150] sm:$0xff] %vm1623, %v1195
        %1667 = vst.msk [vmem:[%s232 + $0x158] sm:$0xff] %vm1623, %v1200
        %1668 = vst.msk [vmem:[%s232 + $0x160] sm:$0xff] %vm1623, %v1205
        %1669 = vst.msk [vmem:[%s232 + $0x168] sm:$0xff] %vm1623, %v1210
        %1670 = vst.msk [vmem:[%s232 + $0x170] sm:$0xff] %vm1623, %v1215
        %1671 = vst.msk [vmem:[%s232 + $0x178] sm:$0xff] %vm1623, %v1220
        %1672 = vst.msk [vmem:[%s232 + $0x180] sm:$0xff] %vm1623, %v1225
        %1673 = vst.msk [vmem:[%s232 + $0x188] sm:$0xff] %vm1623, %v1230
        %1674 = vst.msk [vmem:[%s232 + $0x190] sm:$0xff] %vm1623, %v1235
        %1675 = vst.msk [vmem:[%s232 + $0x198] sm:$0xff] %vm1623, %v1240
        %1676 = vst.msk [vmem:[%s232 + $0x1a0] sm:$0xff] %vm1623, %v1245
        %1677 = vst.msk [vmem:[%s232 + $0x1a8] sm:$0xff] %vm1623, %v1250
        %1678 = vst.msk [vmem:[%s232 + $0x1b0] sm:$0xff] %vm1623, %v1255
        %1679 = vst.msk [vmem:[%s232 + $0x1b8] sm:$0xff] %vm1623, %v1260
        %1680 = vst.msk [vmem:[%s232 + $0x1c0] sm:$0xff] %vm1623, %v1265
        %1681 = vst.msk [vmem:[%s232 + $0x1c8] sm:$0xff] %vm1623, %v1270
        %1682 = vst.msk [vmem:[%s232 + $0x1d0] sm:$0xff] %vm1623, %v1275
        %1683 = vst.msk [vmem:[%s232 + $0x1d8] sm:$0xff] %vm1623, %v1280
        %1684 = vst.msk [vmem:[%s232 + $0x1e0] sm:$0xff] %vm1623, %v1285
        %1685 = vst.msk [vmem:[%s232 + $0x1e8] sm:$0xff] %vm1623, %v1290
        %1686 = vst.msk [vmem:[%s232 + $0x1f0] sm:$0xff] %vm1623, %v1295
        %1687 = vst.msk [vmem:[%s232 + $0x1f8] sm:$0xff] %vm1623, %v1300
        %1688 = vst.msk [vmem:[%s232 + $0x200] sm:$0xff] %vm1623, %v1305
        %1689 = vst.msk [vmem:[%s232 + $0x208] sm:$0xff] %vm1623, %v1310
        %1690 = vst.msk [vmem:[%s232 + $0x210] sm:$0xff] %vm1623, %v1315
        %1691 = vst.msk [vmem:[%s232 + $0x218] sm:$0xff] %vm1623, %v1320
        %1692 = vst.msk [vmem:[%s232 + $0x220] sm:$0xff] %vm1623, %v1325
        %1693 = vst.msk [vmem:[%s232 + $0x228] sm:$0xff] %vm1623, %v1330
        %1694 = vst.msk [vmem:[%s232 + $0x230] sm:$0xff] %vm1623, %v1335
        %1695 = vst.msk [vmem:[%s232 + $0x238] sm:$0xff] %vm1623, %v1340
        %1696 = vst.msk [vmem:[%s232 + $0x240] sm:$0xff] %vm1623, %v1345
        %1697 = vst.msk [vmem:[%s232 + $0x248] sm:$0xff] %vm1623, %v1350
        %1698 = vst.msk [vmem:[%s232 + $0x250] sm:$0xff] %vm1623, %v1355
        %1699 = vst.msk [vmem:[%s232 + $0x258] sm:$0xff] %vm1623, %v1360
        %1700 = vst.msk [vmem:[%s232 + $0x260] sm:$0xff] %vm1623, %v1365
        %1701 = vst.msk [vmem:[%s232 + $0x268] sm:$0xff] %vm1623, %v1370
        %1702 = vst.msk [vmem:[%s232 + $0x270] sm:$0xff] %vm1623, %v1375
        %1703 = vst.msk [vmem:[%s232 + $0x278] sm:$0xff] %vm1623, %v1380
        %1704 = vst.msk [vmem:[%s232 + $0x280] sm:$0xff] %vm1623, %v1385
        %1705 = vst.msk [vmem:[%s232 + $0x288] sm:$0xff] %vm1623, %v1390
        %1706 = vst.msk [vmem:[%s232 + $0x290] sm:$0xff] %vm1623, %v1395
        %1707 = vst.msk [vmem:[%s232 + $0x298] sm:$0xff] %vm1623, %v1400
        %1708 = vst.msk [vmem:[%s232 + $0x2a0] sm:$0xff] %vm1623, %v1405
        %1709 = vst.msk [vmem:[%s232 + $0x2a8] sm:$0xff] %vm1623, %v1410
        %1710 = vst.msk [vmem:[%s232 + $0x2b0] sm:$0xff] %vm1623, %v1415
        %1711 = vst.msk [vmem:[%s232 + $0x2b8] sm:$0xff] %vm1623, %v1420
        %1712 = vst.msk [vmem:[%s232 + $0x2c0] sm:$0xff] %vm1623, %v1425
        %1713 = vst.msk [vmem:[%s232 + $0x2c8] sm:$0xff] %vm1623, %v1430
        %1714 = vst.msk [vmem:[%s232 + $0x2d0] sm:$0xff] %vm1623, %v1435
        %1715 = vst.msk [vmem:[%s232 + $0x2d8] sm:$0xff] %vm1623, %v1440
        %1716 = vst.msk [vmem:[%s232 + $0x2e0] sm:$0xff] %vm1623, %v1445
        %1717 = vst.msk [vmem:[%s232 + $0x2e8] sm:$0xff] %vm1623, %v1450
        %1718 = vst.msk [vmem:[%s232 + $0x2f0] sm:$0xff] %vm1623, %v1455
        %1719 = vst.msk [vmem:[%s232 + $0x2f8] sm:$0xff] %vm1623, %v1460
        %1720 = vst.msk [vmem:[%s232 + $0x300] sm:$0xff] %vm1623, %v1465
        %1721 = vst.msk [vmem:[%s232 + $0x308] sm:$0xff] %vm1623, %v1470
        %1722 = vst.msk [vmem:[%s232 + $0x310] sm:$0xff] %vm1623, %v1475
        %1723 = vst.msk [vmem:[%s232 + $0x318] sm:$0xff] %vm1623, %v1480
        %1724 = vst.msk [vmem:[%s232 + $0x320] sm:$0xff] %vm1623, %v1485
        %1725 = vst.msk [vmem:[%s232 + $0x328] sm:$0xff] %vm1623, %v1490
        %1726 = vst.msk [vmem:[%s232 + $0x330] sm:$0xff] %vm1623, %v1495
        %1727 = vst.msk [vmem:[%s232 + $0x338] sm:$0xff] %vm1623, %v1500
        %1728 = vst.msk [vmem:[%s232 + $0x340] sm:$0xff] %vm1623, %v1505
        %1729 = vst.msk [vmem:[%s232 + $0x348] sm:$0xff] %vm1623, %v1510
        %1730 = vst.msk [vmem:[%s232 + $0x350] sm:$0xff] %vm1623, %v1515
        %1731 = vst.msk [vmem:[%s232 + $0x358] sm:$0xff] %vm1623, %v1520
        %1732 = vst.msk [vmem:[%s232 + $0x360] sm:$0xff] %vm1623, %v1525
        %1733 = vst.msk [vmem:[%s232 + $0x368] sm:$0xff] %vm1623, %v1530
        %1734 = vst.msk [vmem:[%s232 + $0x370] sm:$0xff] %vm1623, %v1535
        %1735 = vst.msk [vmem:[%s232 + $0x378] sm:$0xff] %vm1623, %v1540
        %1736 = vst.msk [vmem:[%s232 + $0x380] sm:$0xff] %vm1623, %v1545
        %1737 = vst.msk [vmem:[%s232 + $0x388] sm:$0xff] %vm1623, %v1550
        %1738 = vst.msk [vmem:[%s232 + $0x390] sm:$0xff] %vm1623, %v1555
        %1739 = vst.msk [vmem:[%s232 + $0x398] sm:$0xff] %vm1623, %v1560
        %1740 = vst.msk [vmem:[%s232 + $0x3a0] sm:$0xff] %vm1623, %v1565
        %1741 = vst.msk [vmem:[%s232 + $0x3a8] sm:$0xff] %vm1623, %v1570
        %1742 = vst.msk [vmem:[%s232 + $0x3b0] sm:$0xff] %vm1623, %v1575
        %1743 = vst.msk [vmem:[%s232 + $0x3b8] sm:$0xff] %vm1623, %v1580
        %1744 = vst.msk [vmem:[%s232 + $0x3c0] sm:$0xff] %vm1623, %v1585
        %1745 = vst.msk [vmem:[%s232 + $0x3c8] sm:$0xff] %vm1623, %v1590
        %1746 = vst.msk [vmem:[%s232 + $0x3d0] sm:$0xff] %vm1623, %v1595
        %1747 = vst.msk [vmem:[%s232 + $0x3d8] sm:$0xff] %vm1623, %v1600
        %1748 = vst.msk [vmem:[%s232 + $0x3e0] sm:$0xff] %vm1623, %v1605
        %1749 = vst.msk [vmem:[%s232 + $0x3e8] sm:$0xff] %vm1623, %v1610
        %1750 = vst.msk [vmem:[%s232 + $0x3f0] sm:$0xff] %vm1623, %v1615
        %1751 = vst.msk [vmem:[%s232 + $0x3f8] sm:$0xff] %vm1623, %v1620
        %s1752 = smul.u32 128, %s23
        %p1753 = scmp.lt.s32.totalorder %s22, 1
        %s1754 = scalar_select %p1753, %s22, 1
        %p1755 = scmp.lt.s32.totalorder %s1752, 127
        %s1756 = scalar_select %p1755, %s1752, 127
        %s1757 = smul.addr %s1754, 128
        %s1758 = sadd.s32 %s1756, %s1757
        %s1759 = smul.addr %s1758, 8
        %s1760 = scalar_lea.vmem %s3, %s1759
        // Predicated region
        $region41: #{tpu_custom_call.1} parent=31 // pred_check
          %p1761 = pneg %p120
        $region42: #{tpu_custom_call.1} parent=31 // pred_check_branch
          %1763 = sbr.rel (%p1761) target = $region44
        $region43: #{tpu_custom_call.1} parent=31 // pred_region
          %s1764 = smul.u32 128, %s23
        $region44: #{tpu_custom_call.1} parent=31 // pred_fallthru
          _
      $region32: #{tpu_custom_call.1} parent=5 // pred_fallthru
        _
      %p1765 = scmp.le.s32.totalorder 2, %s13
      // Predicated region
      $region45: #{tpu_custom_call.1} parent=5 // pred_check
        %p1766 = pneg %p1765
      $region46: #{tpu_custom_call.1} parent=5 // pred_check_branch
        %1768 = sbr.rel (%p1766) target = $region48
      $region47: #{tpu_custom_call.1} parent=5 // pred_region
        %s1769 = ssub.s32 %s13, 2
        // Predicated region
        $region49: #{tpu_custom_call.1} parent=47 // pred_check
          %p1770 = pneg %p126
        $region50: #{tpu_custom_call.1} parent=47 // pred_check_branch
          %1772 = sbr.rel (%p1770) target = $region52
        $region51: #{tpu_custom_call.1} parent=47 // pred_region
          %s1773 = smul.u32 128, %s25
          %p1774 = scmp.lt.s32.totalorder %s24, 1
          %s1775 = scalar_select %p1774, %s24, 1
          %p1776 = scmp.lt.s32.totalorder %s1773, 127
          %s1777 = scalar_select %p1776, %s1773, 127
          %s1778 = smul.addr %s1775, 128
          %s1779 = sadd.s32 %s1777, %s1778
          %s1780 = smul.addr %s1779, 8
          %s1781 = scalar_lea.vmem %s3, %s1780
        $region52: #{tpu_custom_call.1} parent=47 // pred_fallthru
          _
      $region48: #{tpu_custom_call.1} parent=5 // pred_fallthru
        _
    $region6: #{tpu_custom_call.1} parent=1 // loop_footer
      %s17 = sadd.s32 1, %s13
    $region7: #{tpu_custom_call.1} parent=1 // loop_footer_branch
      %12 = sbr.rel target = $region3
    $region8: #{tpu_custom_call.1} parent=1 // loop_exit
      _
    %1782 = vsyncpa [#allocation3], 1
    %s1783 = scalar_lea.sflag [#allocation3], 1
    %1784 = vsyncpa %s1783, 1
    %1785 = vsyncpa [#allocation5], 1

</llo_original>
